<compile_context>
chip_gen: v7x
topology: tpu7x:2x2x1
jax: 0.10.0
libtpu: 0.0.40
codegen_flags: <defaults>
</compile_context>

<pallas_src>
import math
import jax
import jax.numpy as jnp
from jax.experimental import pallas as pl
from jax.experimental.pallas import tpu as pltpu


def _round_up(x, m):
    return ((x + m - 1) // m) * m


def _pick_block_rows(batch, max_block_rows=512, num_tensorcores=2):
    """Adaptive batch tile: split the batch ~evenly across TensorCores (v7x has 2 per chip),
    rounded up to 16 rows (bf16 packs 16 rows per sublane group), capped for large batches
    (512-row tiles already reach ~85% of the HBM roofline)."""
    per_core = -(-batch // num_tensorcores)            # ceil(batch / num_tensorcores)
    return max(16, min(_round_up(per_core, 16), max_block_rows))


def _make_kernel(mxu_dtype):
    """Kernel closure; the MXU operand dtype for the MLP layers is a compile-time constant."""

    def kernel(x_ref, kre_ref, kim_ref, w1_ref, b1_ref, w2_ref, b2_ref,
               w3_ref, b3_ref, o_ref):
        x = x_ref[...]                                              # (rows, 2*Na) f32

        # PhaseShifter beamforming: two tiny dots against the precomputed real / imag halves
        # of the block kernel.  Splitting re/im on the *weight* side (in the wrapper) avoids
        # in-kernel lane slices of the beamformed signal (sub-vreg slices are not views).
        # Kept in f32 for parity with the f32 PyTorch module (K = 2*Na: MXU cost negligible).
        bf_re = jnp.dot(x, kre_ref[...], preferred_element_type=jnp.float32)
        bf_im = jnp.dot(x, kim_ref[...], preferred_element_type=jnp.float32)

        # noise_power = 0.0 in this instantiation -> the additive noise term is exactly 0.
        # TODO(synk): if noise_power > 0 were needed, draw noise via pltpu.prng_random_bits.

        # ComputePower: |bf|^2 per wide beam.  Already >= 0, so the module's ReLU right
        # after it is a no-op and is omitted.
        power = bf_re * bf_re + bf_im * bf_im                       # (rows, n_wide) f32

        # dense1 -> ReLU  (MXU operands bf16, bias add / ReLU stay f32 on the VPU: v5e has
        # no bf16 VPU path).
        h1 = jnp.dot(power.astype(mxu_dtype), w1_ref[...],
                     preferred_element_type=jnp.float32) + b1_ref[...]
        h1 = jnp.maximum(h1, 0.0)
        # dense2 -> ReLU
        h2 = jnp.dot(h1.astype(mxu_dtype), w2_ref[...],
                     preferred_element_type=jnp.float32) + b2_ref[...]
        h2 = jnp.maximum(h2, 0.0)
        # dense3 (logits; lane-padded to 128 so the store is unmasked / lane-dense).
        out = jnp.dot(h2.astype(mxu_dtype), w3_ref[...],
                      preferred_element_type=jnp.float32) + b3_ref[...]

        # Note: padded batch rows hold junk (ReLU(bias) propagates); the wrapper slices them
        # off.  Mask them here if this kernel ever grows a reduction over the batch axis.
        o_ref[...] = out.astype(o_ref.dtype)

    return kernel


def beam_classifier_forward(x, theta, w1, b1, w2, b2, w3, b3, *, n_antenna,
                            max_block_rows=512, num_tensorcores=2,
                            mxu_dtype=jnp.bfloat16, store_dtype=jnp.bfloat16):
    B = x.shape[0]
    n_wide = theta.shape[1]
    n_narrow = w3.shape[1]
    scale = math.sqrt(float(n_antenna))

    # --- Precompute the PhaseShifter block kernel outside the Pallas kernel (hoists the
    #     EUP cos/sin prologue into XLA; depends only on theta).  Passed as separate
    #     real-output / imag-output column blocks so the kernel never lane-slices bf.
    real_k = jnp.cos(theta) / scale                                  # (Na, Nw)
    imag_k = jnp.sin(theta) / scale
    k_re = jnp.concatenate([real_k, imag_k], axis=0).astype(jnp.float32)   # (2*Na, Nw)
    k_im = jnp.concatenate([-imag_k, real_k], axis=0).astype(jnp.float32)  # (2*Na, Nw)

    # --- Lane-dense output: zero-pad the last layer to a multiple of 128 output lanes.
    n_out_pad = _round_up(n_narrow, 128)
    w3p = jnp.pad(w3, ((0, 0), (0, n_out_pad - n_narrow)))
    b3p = jnp.pad(b3, ((0, 0), (0, n_out_pad - n_narrow)))

    # --- Adaptive batch tiling (even tile count for small B -> both v7x TCs busy).
    block_rows = _pick_block_rows(B, max_block_rows, num_tensorcores)
    b_pad = _round_up(B, block_rows)
    # x stays f32: a wrapper-side bf16 cast would *add* HBM traffic (read f32 + write bf16)
    # and cost accuracy on the beamforming dot.
    xp = x.astype(jnp.float32)
    if b_pad != B:
        xp = jnp.pad(xp, ((0, b_pad - B), (0, 0)))

    # --- MLP weights in bf16 for the MXU; biases stay f32 (added to f32 accumulators).
    w1m = w1.astype(mxu_dtype)
    w2m = w2.astype(mxu_dtype)
    w3m = w3p.astype(mxu_dtype)
    b1f = b1.astype(jnp.float32)
    b2f = b2.astype(jnp.float32)
    b3f = b3p.astype(jnp.float32)

    grid = (b_pad // block_rows,)
    const = lambda i: (0, 0)   # weights: same block every step -> DMA'd once, stay resident

    out_padded = pl.pallas_call(
        _make_kernel(mxu_dtype),
        out_shape=jax.ShapeDtypeStruct((b_pad, n_out_pad), store_dtype),
        grid=grid,
        in_specs=[
            pl.BlockSpec((block_rows, 2 * n_antenna), lambda i: (i, 0)),  # x tile (f32)
            pl.BlockSpec((2 * n_antenna, n_wide), const),                 # K_re
            pl.BlockSpec((2 * n_antenna, n_wide), const),                 # K_im
            pl.BlockSpec((n_wide, 2 * n_wide), const),                    # w1
            pl.BlockSpec((1, 2 * n_wide), const),                         # b1
            pl.BlockSpec((2 * n_wide, 3 * n_wide), const),                # w2
            pl.BlockSpec((1, 3 * n_wide), const),                         # b2
            pl.BlockSpec((3 * n_wide, n_out_pad), const),                 # w3 (lane-padded)
            pl.BlockSpec((1, n_out_pad), const),                          # b3 (lane-padded)
        ],
        out_specs=pl.BlockSpec((block_rows, n_out_pad), lambda i: (i, 0)),
        compiler_params=pltpu.CompilerParams(
            dimension_semantics=("parallel",),        # batch tiles shard across TCs on v7x
            vmem_limit_bytes=32 * 1024 * 1024,        # ample headroom; ~1 MiB used per tile
        ),
    )(xp, k_re, k_im, w1m, b1f, w2m, b2f, w3m, b3f)

    return out_padded[:B, :n_narrow].astype(jnp.float32)


def _reference_forward(x, theta, w1, b1, w2, b2, w3, b3, *, n_antenna,
                       mxu_dtype=jnp.bfloat16):
    """Pure-JAX reference mirroring the PyTorch forward (noise_power=0) with the kernel's
    precision policy: f32 beamforming dot, bf16-operand / f32-accumulate MLP matmuls."""
    scale = math.sqrt(float(n_antenna))
    real_k = jnp.cos(theta) / scale
    imag_k = jnp.sin(theta) / scale
    K = jnp.concatenate(
        [jnp.concatenate([real_k, -imag_k], axis=-1),
         jnp.concatenate([imag_k, real_k], axis=-1)], axis=0)

    def mm(a, w):
        return jnp.dot(a.astype(mxu_dtype), w.astype(mxu_dtype),
                       preferred_element_type=jnp.float32)

    bf = jnp.dot(x.astype(jnp.float32), K, preferred_element_type=jnp.float32)
    nw = theta.shape[1]
    power = bf[:, :nw] ** 2 + bf[:, nw:] ** 2
    h = jax.nn.relu(mm(power, w1) + b1)
    h = jax.nn.relu(mm(h, w2) + b2)
    return mm(h, w3) + b3


if __name__ == "__main__":
    # Module-consistent shapes; batch big enough to exercise adaptive tiling + row padding.
    B = 300
    n_antenna = 16
    n_wide = 8
    n_narrow = 8

    key = jax.random.PRNGKey(0)
    ks = jax.random.split(key, 8)

    x = jax.random.normal(ks[0], (B, 2 * n_antenna), dtype=jnp.float32)

    # PhaseShifter theta ~ U(0, 2*pi)  (as in reset_parameters)
    theta = jax.random.uniform(ks[1], (n_antenna, n_wide), minval=0.0,
                               maxval=2.0 * math.pi, dtype=jnp.float32)

    def linear_init(kw, kb, fan_in, fan_out):
        bound = 1.0 / math.sqrt(fan_in)
        w = jax.random.uniform(kw, (fan_in, fan_out), minval=-bound, maxval=bound,
                               dtype=jnp.float32)
        b = jax.random.uniform(kb, (1, fan_out), minval=-bound, maxval=bound,
                               dtype=jnp.float32)
        return w, b

    w1, b1 = linear_init(ks[2], ks[3], n_wide, 2 * n_wide)
    w2, b2 = linear_init(ks[4], ks[5], 2 * n_wide, 3 * n_wide)
    w3, b3 = linear_init(ks[6], ks[7], 3 * n_wide, n_narrow)

    out = beam_classifier_forward(x, theta, w1, b1, w2, b2, w3, b3,
                                  n_antenna=n_antenna)
    out = jax.block_until_ready(out)

    ref = _reference_forward(x, theta, w1, b1, w2, b2, w3, b3, n_antenna=n_antenna)
    # The kernel stores the logits slab as bf16; round the reference identically so the
    # comparison isolates genuine kernel errors rather than the documented store precision.
    ref = jnp.asarray(ref, jnp.bfloat16).astype(jnp.float32)
    ref = jax.block_until_ready(ref)

    assert out.shape == (B, n_narrow)
    assert jnp.allclose(out, ref, atol=1e-2, rtol=1e-2), "Pallas kernel mismatch vs reference"

    print("KERNEL_OK")
</pallas_src>

<mosaic_0001>
module attributes {stable_mosaic.version = 11 : i64} {
  func.func @kernel(%arg0: i32, %arg1: memref<160x32xf32, #tpu.memory_space<vmem>>, %arg2: memref<32x8xf32, #tpu.memory_space<vmem>>, %arg3: memref<32x8xf32, #tpu.memory_space<vmem>>, %arg4: memref<8x16xbf16, #tpu.memory_space<vmem>>, %arg5: memref<1x16xf32, #tpu.memory_space<vmem>>, %arg6: memref<16x24xbf16, #tpu.memory_space<vmem>>, %arg7: memref<1x24xf32, #tpu.memory_space<vmem>>, %arg8: memref<24x128xbf16, #tpu.memory_space<vmem>>, %arg9: memref<1x128xf32, #tpu.memory_space<vmem>>, %arg10: memref<160x128xbf16, #tpu.memory_space<vmem>>) attributes {dimension_semantics = [#tpu.dimension_semantics<parallel>], iteration_bounds = array<i64: 2>, scalar_prefetch = 0 : i64, scratch_operands = 0 : i64, tpu.core_type = #tpu.core_type<tc>, window_params = [{transform_indices = @transform_0, window_bounds = array<i64: 160, 32>}, {pipeline_mode = #tpu.pipeline_mode<synchronous>, transform_indices = @transform_1, window_bounds = array<i64: 32, 8>}, {pipeline_mode = #tpu.pipeline_mode<synchronous>, transform_indices = @transform_2, window_bounds = array<i64: 32, 8>}, {pipeline_mode = #tpu.pipeline_mode<synchronous>, transform_indices = @transform_3, window_bounds = array<i64: 8, 16>}, {pipeline_mode = #tpu.pipeline_mode<synchronous>, transform_indices = @transform_4, window_bounds = array<i64: 1, 16>}, {pipeline_mode = #tpu.pipeline_mode<synchronous>, transform_indices = @transform_5, window_bounds = array<i64: 16, 24>}, {pipeline_mode = #tpu.pipeline_mode<synchronous>, transform_indices = @transform_6, window_bounds = array<i64: 1, 24>}, {pipeline_mode = #tpu.pipeline_mode<synchronous>, transform_indices = @transform_7, window_bounds = array<i64: 24, 128>}, {pipeline_mode = #tpu.pipeline_mode<synchronous>, transform_indices = @transform_8, window_bounds = array<i64: 1, 128>}, {transform_indices = @transform_9, window_bounds = array<i64: 160, 128>}]} {
    %c0 = arith.constant 0 : index
    %c0_0 = arith.constant 0 : index
    %0 = vector.load %arg1[%c0, %c0_0] : memref<160x32xf32, #tpu.memory_space<vmem>>, vector<160x32xf32>
    %c0_1 = arith.constant 0 : index
    %c0_2 = arith.constant 0 : index
    %1 = vector.load %arg2[%c0_1, %c0_2] : memref<32x8xf32, #tpu.memory_space<vmem>>, vector<32x8xf32>
    %cst = arith.constant dense<0.000000e+00> : vector<160x8xf32>
    %2 = tpu.matmul %0, %1, %cst {dimension_numbers = #tpu.dot_dimension_numbers<[1], [0], [0], [1], [0, 0, 1, 1], [], []>} : vector<160x32xf32>, vector<32x8xf32>, vector<160x8xf32> -> vector<160x8xf32>
    %c0_3 = arith.constant 0 : index
    %c0_4 = arith.constant 0 : index
    %3 = vector.load %arg3[%c0_3, %c0_4] : memref<32x8xf32, #tpu.memory_space<vmem>>, vector<32x8xf32>
    %cst_5 = arith.constant dense<0.000000e+00> : vector<160x8xf32>
    %4 = tpu.matmul %0, %3, %cst_5 {dimension_numbers = #tpu.dot_dimension_numbers<[1], [0], [0], [1], [0, 0, 1, 1], [], []>} : vector<160x32xf32>, vector<32x8xf32>, vector<160x8xf32> -> vector<160x8xf32>
    %5 = arith.mulf %2, %2 : vector<160x8xf32>
    %6 = arith.mulf %4, %4 : vector<160x8xf32>
    %7 = arith.addf %5, %6 : vector<160x8xf32>
    %8 = arith.truncf %7 : vector<160x8xf32> to vector<160x8xbf16>
    %c0_6 = arith.constant 0 : index
    %c0_7 = arith.constant 0 : index
    %9 = vector.load %arg4[%c0_6, %c0_7] : memref<8x16xbf16, #tpu.memory_space<vmem>>, vector<8x16xbf16>
    %cst_8 = arith.constant dense<0.000000e+00> : vector<160x16xf32>
    %10 = tpu.matmul %8, %9, %cst_8 {dimension_numbers = #tpu.dot_dimension_numbers<[1], [0], [0], [1], [0, 0, 1, 1], [], []>} : vector<160x8xbf16>, vector<8x16xbf16>, vector<160x16xf32> -> vector<160x16xf32>
    %c0_9 = arith.constant 0 : index
    %c0_10 = arith.constant 0 : index
    %11 = vector.load %arg5[%c0_9, %c0_10] : memref<1x16xf32, #tpu.memory_space<vmem>>, vector<1x16xf32>
    %12 = vector.broadcast %11 : vector<1x16xf32> to vector<160x16xf32>
    %13 = arith.addf %10, %12 : vector<160x16xf32>
    %cst_11 = arith.constant 0.000000e+00 : f32
    %14 = vector.broadcast %cst_11 : f32 to vector<160x16xf32>
    %15 = arith.maximumf %13, %14 : vector<160x16xf32>
    %16 = arith.truncf %15 : vector<160x16xf32> to vector<160x16xbf16>
    %c0_12 = arith.constant 0 : index
    %c0_13 = arith.constant 0 : index
    %17 = vector.load %arg6[%c0_12, %c0_13] : memref<16x24xbf16, #tpu.memory_space<vmem>>, vector<16x24xbf16>
    %cst_14 = arith.constant dense<0.000000e+00> : vector<160x24xf32>
    %18 = tpu.matmul %16, %17, %cst_14 {dimension_numbers = #tpu.dot_dimension_numbers<[1], [0], [0], [1], [0, 0, 1, 1], [], []>} : vector<160x16xbf16>, vector<16x24xbf16>, vector<160x24xf32> -> vector<160x24xf32>
    %c0_15 = arith.constant 0 : index
    %c0_16 = arith.constant 0 : index
    %19 = vector.load %arg7[%c0_15, %c0_16] : memref<1x24xf32, #tpu.memory_space<vmem>>, vector<1x24xf32>
    %20 = vector.broadcast %19 : vector<1x24xf32> to vector<160x24xf32>
    %21 = arith.addf %18, %20 : vector<160x24xf32>
    %cst_17 = arith.constant 0.000000e+00 : f32
    %22 = vector.broadcast %cst_17 : f32 to vector<160x24xf32>
    %23 = arith.maximumf %21, %22 : vector<160x24xf32>
    %24 = arith.truncf %23 : vector<160x24xf32> to vector<160x24xbf16>
    %c0_18 = arith.constant 0 : index
    %c0_19 = arith.constant 0 : index
    %25 = vector.load %arg8[%c0_18, %c0_19] : memref<24x128xbf16, #tpu.memory_space<vmem>>, vector<24x128xbf16>
    %cst_20 = arith.constant dense<0.000000e+00> : vector<160x128xf32>
    %26 = tpu.matmul %24, %25, %cst_20 {dimension_numbers = #tpu.dot_dimension_numbers<[1], [0], [0], [1], [0, 0, 1, 1], [], []>} : vector<160x24xbf16>, vector<24x128xbf16>, vector<160x128xf32> -> vector<160x128xf32>
    %c0_21 = arith.constant 0 : index
    %c0_22 = arith.constant 0 : index
    %27 = vector.load %arg9[%c0_21, %c0_22] : memref<1x128xf32, #tpu.memory_space<vmem>>, vector<1x128xf32>
    %28 = vector.broadcast %27 : vector<1x128xf32> to vector<160x128xf32>
    %29 = arith.addf %26, %28 : vector<160x128xf32>
    %30 = arith.truncf %29 : vector<160x128xf32> to vector<160x128xbf16>
    %c0_23 = arith.constant 0 : index
    %c0_24 = arith.constant 0 : index
    %31 = vector.load %arg10[%c0_23, %c0_24] : memref<160x128xbf16, #tpu.memory_space<vmem>>, vector<160x128xbf16>
    tpu.vector_store %arg10[%c0_23, %c0_24], %30 {strides = array<i32>} : memref<160x128xbf16, #tpu.memory_space<vmem>>, vector<160x128xbf16>,
    return
  }
  func.func @transform_0(%arg0: i32) -> (i32, i32) {
    %c0_i32 = arith.constant 0 : i32
    %c0_i32_0 = arith.constant 0 : i32
    return %arg0, %c0_i32 : i32, i32
  }
  func.func @transform_1(%arg0: i32) -> (i32, i32) {
    %c0_i32 = arith.constant 0 : i32
    %c0_i32_0 = arith.constant 0 : i32
    %c0_i32_1 = arith.constant 0 : i32
    return %c0_i32, %c0_i32_0 : i32, i32
  }
  func.func @transform_2(%arg0: i32) -> (i32, i32) {
    %c0_i32 = arith.constant 0 : i32
    %c0_i32_0 = arith.constant 0 : i32
    %c0_i32_1 = arith.constant 0 : i32
    return %c0_i32, %c0_i32_0 : i32, i32
  }
  func.func @transform_3(%arg0: i32) -> (i32, i32) {
    %c0_i32 = arith.constant 0 : i32
    %c0_i32_0 = arith.constant 0 : i32
    %c0_i32_1 = arith.constant 0 : i32
    return %c0_i32, %c0_i32_0 : i32, i32
  }
  func.func @transform_4(%arg0: i32) -> (i32, i32) {
    %c0_i32 = arith.constant 0 : i32
    %c0_i32_0 = arith.constant 0 : i32
    %c0_i32_1 = arith.constant 0 : i32
    return %c0_i32, %c0_i32_0 : i32, i32
  }
  func.func @transform_5(%arg0: i32) -> (i32, i32) {
    %c0_i32 = arith.constant 0 : i32
    %c0_i32_0 = arith.constant 0 : i32
    %c0_i32_1 = arith.constant 0 : i32
    return %c0_i32, %c0_i32_0 : i32, i32
  }
  func.func @transform_6(%arg0: i32) -> (i32, i32) {
    %c0_i32 = arith.constant 0 : i32
    %c0_i32_0 = arith.constant 0 : i32
    %c0_i32_1 = arith.constant 0 : i32
    return %c0_i32, %c0_i32_0 : i32, i32
  }
  func.func @transform_7(%arg0: i32) -> (i32, i32) {
    %c0_i32 = arith.constant 0 : i32
    %c0_i32_0 = arith.constant 0 : i32
    %c0_i32_1 = arith.constant 0 : i32
    return %c0_i32, %c0_i32_0 : i32, i32
  }
  func.func @transform_8(%arg0: i32) -> (i32, i32) {
    %c0_i32 = arith.constant 0 : i32
    %c0_i32_0 = arith.constant 0 : i32
    %c0_i32_1 = arith.constant 0 : i32
    return %c0_i32, %c0_i32_0 : i32, i32
  }
  func.func @transform_9(%arg0: i32) -> (i32, i32) {
    %c0_i32 = arith.constant 0 : i32
    %c0_i32_0 = arith.constant 0 : i32
    return %arg0, %c0_i32 : i32, i32
  }
}

</mosaic_0001>

<llo_original>
// kernel: tpu_custom_call.1
$region0: #{tpu_custom_call.1}
  #allocation0 [shape = 'u32[]', space=smem, size = 0x4, offset = 0x4, fixed_abs, tag = 'smem constant byte address 0x4 - core index']
  #allocation1 [shape = 'u32[144,128]{1,0:T(1,128)}', space=vmem, size = 0x12000, scoped, tag = 'internal scratch']
  %s0 = inlined_call_operand.vmem [shape: f32[320,32], index: 0, kind: input, shape index: {}]
  %s1 = inlined_call_operand.vmem [shape: f32[32,8], index: 1, kind: input, shape index: {}]
  %s2 = inlined_call_operand.vmem [shape: f32[32,8], index: 2, kind: input, shape index: {}]
  %s3 = inlined_call_operand.vmem [shape: bf16[8,16], index: 3, kind: input, shape index: {}]
  %s4 = inlined_call_operand.vmem [shape: f32[1,16], index: 4, kind: input, shape index: {}]
  %s5 = inlined_call_operand.vmem [shape: bf16[16,24], index: 5, kind: input, shape index: {}]
  %s6 = inlined_call_operand.vmem [shape: f32[1,24], index: 6, kind: input, shape index: {}]
  %s7 = inlined_call_operand.vmem [shape: bf16[24,128], index: 7, kind: input, shape index: {}]
  %s8 = inlined_call_operand.vmem [shape: f32[1,128], index: 8, kind: input, shape index: {}]
  %s9 = inlined_call_operand.hbm [shape: bf16[320,128], index: 9, kind: output, shape index: {}]
  %s10 = sld [smem:[#allocation0]]
  $region69: #{tpu_custom_call.1} parent=0
    _
  %s12 = ssub.s32 1, %s10
  %s13 = scalar_select 0, %s12, %s10
  $region1: #{tpu_custom_call.1} parent=0
    #allocation2 [shape = 'u8[81920]{0}', space=vmem, size = 0x14000, scoped, tag = 'output window, operand 0']
    #allocation3 [shape = 's32[2]{0}', space=sflag, size = 0x8, scoped, tag = 'scoped memory for tpu_custom_call.1']
    %14 = vsyncpa [#allocation3], 0
    %s15 = scalar_lea.sflag [#allocation3], 1
    %16 = vsyncpa %s15, 0
    loop: start=0, step=1, limit=4
    $region2: #{tpu_custom_call.1} parent=1 // loop_pre_header
      _
    $region3: #{tpu_custom_call.1} parent=1 // loop_header
      %s18 = sphi 0, %s22
      %p19 = scmp.ge.s32.totalorder %s18, 4
      %s28 = sphi 0, %s30
      %s31 = sphi 0, %s28
      %s32 = sphi 0, %s31
      %s48 = sphi 0, %s32
      %s52 = sphi 0, %s52
      %s54 = sphi 0, %s52
      %s55 = sphi 0, %s54
      %s69 = sphi 0, %s55
      %s73 = sphi 0, %s73
      %s75 = sphi 0, %s73
      %s76 = sphi 0, %s75
      %s90 = sphi 0, %s76
      %s94 = sphi 0, %s94
      %s96 = sphi 0, %s94
      %s97 = sphi 0, %s96
      %s111 = sphi 0, %s97
      %s115 = sphi 0, %s115
      %s117 = sphi 0, %s115
      %s118 = sphi 0, %s117
      %s132 = sphi 0, %s118
      %s136 = sphi 0, %s136
      %s138 = sphi 0, %s136
      %s139 = sphi 0, %s138
      %s153 = sphi 0, %s139
      %s157 = sphi 0, %s157
      %s159 = sphi 0, %s157
      %s160 = sphi 0, %s159
      %s174 = sphi 0, %s160
      %s178 = sphi 0, %s178
      %s180 = sphi 0, %s178
      %s181 = sphi 0, %s180
      %s195 = sphi 0, %s181
      %s199 = sphi 0, %s199
      %s201 = sphi 0, %s199
      %s202 = sphi 0, %s201
      %s216 = sphi 0, %s202
      %s222 = sphi 0, %s224
      %s225 = sphi 0, %s222
      %s226 = sphi 0, %s225
      %s242 = sphi 0, %s226
    $region4: #{tpu_custom_call.1} parent=1 // loop_header_branch
      %21 = sbr.rel (%p19) target = $region8
    $region5: #{tpu_custom_call.1} parent=1 // loop_body
      %s23 = ssub.s32 %s18, 1
      %s24 = ssub.s32 %s18, 2
      %s25 = sadd.s32 %s18, 1
      %s26 = ssub.s32 %s18, %s25
      %p27 = scmp.eq.s32.totalorder %s26, 0
      %s29 = sadd.s32 %s28, 1
      %s30 = scalar_select %p27, %s28, %s29
      %p33 = pneg %p27
      %p34 = scmp.eq.s32.totalorder %s18, 1
      %p35 = por %p33, %p34
      %p36 = scmp.ne.s32.totalorder %s28, %s31
      %p37 = scmp.eq.s32.totalorder %s18, 0
      %p38 = por %p36, %p37
      %p39 = scmp.ne.s32.totalorder %s28, %s31
      %p40 = scmp.eq.s32.totalorder %s23, 1
      %p41 = por %p39, %p40
      %p42 = scmp.ne.s32.totalorder %s31, %s32
      %p43 = scmp.eq.s32.totalorder %s23, 0
      %p44 = por %p42, %p43
      %p45 = scmp.ne.s32.totalorder %s31, %s32
      %p46 = scmp.eq.s32.totalorder %s24, 1
      %p47 = por %p45, %p46
      %p49 = scmp.ne.s32.totalorder %s32, %s48
      %p50 = scmp.eq.s32.totalorder %s24, 0
      %p51 = por %p49, %p50
      %s53 = sadd.s32 %s52, 1
      %p56 = scmp.eq.s32.totalorder %s18, 1
      %p57 = scmp.ne.s32.totalorder %s52, %s54
      %p58 = scmp.eq.s32.totalorder %s18, 0
      %p59 = por %p57, %p58
      %p60 = scmp.ne.s32.totalorder %s52, %s54
      %p61 = scmp.eq.s32.totalorder %s23, 1
      %p62 = por %p60, %p61
      %p63 = scmp.ne.s32.totalorder %s54, %s55
      %p64 = scmp.eq.s32.totalorder %s23, 0
      %p65 = por %p63, %p64
      %p66 = scmp.ne.s32.totalorder %s54, %s55
      %p67 = scmp.eq.s32.totalorder %s24, 1
      %p68 = por %p66, %p67
      %p70 = scmp.ne.s32.totalorder %s55, %s69
      %p71 = scmp.eq.s32.totalorder %s24, 0
      %p72 = por %p70, %p71
      %s74 = sadd.s32 %s73, 1
      %p77 = scmp.eq.s32.totalorder %s18, 1
      %p78 = scmp.ne.s32.totalorder %s73, %s75
      %p79 = scmp.eq.s32.totalorder %s18, 0
      %p80 = por %p78, %p79
      %p81 = scmp.ne.s32.totalorder %s73, %s75
      %p82 = scmp.eq.s32.totalorder %s23, 1
      %p83 = por %p81, %p82
      %p84 = scmp.ne.s32.totalorder %s75, %s76
      %p85 = scmp.eq.s32.totalorder %s23, 0
      %p86 = por %p84, %p85
      %p87 = scmp.ne.s32.totalorder %s75, %s76
      %p88 = scmp.eq.s32.totalorder %s24, 1
      %p89 = por %p87, %p88
      %p91 = scmp.ne.s32.totalorder %s76, %s90
      %p92 = scmp.eq.s32.totalorder %s24, 0
      %p93 = por %p91, %p92
      %s95 = sadd.s32 %s94, 1
      %p98 = scmp.eq.s32.totalorder %s18, 1
      %p99 = scmp.ne.s32.totalorder %s94, %s96
      %p100 = scmp.eq.s32.totalorder %s18, 0
      %p101 = por %p99, %p100
      %p102 = scmp.ne.s32.totalorder %s94, %s96
      %p103 = scmp.eq.s32.totalorder %s23, 1
      %p104 = por %p102, %p103
      %p105 = scmp.ne.s32.totalorder %s96, %s97
      %p106 = scmp.eq.s32.totalorder %s23, 0
      %p107 = por %p105, %p106
      %p108 = scmp.ne.s32.totalorder %s96, %s97
      %p109 = scmp.eq.s32.totalorder %s24, 1
      %p110 = por %p108, %p109
      %p112 = scmp.ne.s32.totalorder %s97, %s111
      %p113 = scmp.eq.s32.totalorder %s24, 0
      %p114 = por %p112, %p113
      %s116 = sadd.s32 %s115, 1
      %p119 = scmp.eq.s32.totalorder %s18, 1
      %p120 = scmp.ne.s32.totalorder %s115, %s117
      %p121 = scmp.eq.s32.totalorder %s18, 0
      %p122 = por %p120, %p121
      %p123 = scmp.ne.s32.totalorder %s115, %s117
      %p124 = scmp.eq.s32.totalorder %s23, 1
      %p125 = por %p123, %p124
      %p126 = scmp.ne.s32.totalorder %s117, %s118
      %p127 = scmp.eq.s32.totalorder %s23, 0
      %p128 = por %p126, %p127
      %p129 = scmp.ne.s32.totalorder %s117, %s118
      %p130 = scmp.eq.s32.totalorder %s24, 1
      %p131 = por %p129, %p130
      %p133 = scmp.ne.s32.totalorder %s118, %s132
      %p134 = scmp.eq.s32.totalorder %s24, 0
      %p135 = por %p133, %p134
      %s137 = sadd.s32 %s136, 1
      %p140 = scmp.eq.s32.totalorder %s18, 1
      %p141 = scmp.ne.s32.totalorder %s136, %s138
      %p142 = scmp.eq.s32.totalorder %s18, 0
      %p143 = por %p141, %p142
      %p144 = scmp.ne.s32.totalorder %s136, %s138
      %p145 = scmp.eq.s32.totalorder %s23, 1
      %p146 = por %p144, %p145
      %p147 = scmp.ne.s32.totalorder %s138, %s139
      %p148 = scmp.eq.s32.totalorder %s23, 0
      %p149 = por %p147, %p148
      %p150 = scmp.ne.s32.totalorder %s138, %s139
      %p151 = scmp.eq.s32.totalorder %s24, 1
      %p152 = por %p150, %p151
      %p154 = scmp.ne.s32.totalorder %s139, %s153
      %p155 = scmp.eq.s32.totalorder %s24, 0
      %p156 = por %p154, %p155
      %s158 = sadd.s32 %s157, 1
      %p161 = scmp.eq.s32.totalorder %s18, 1
      %p162 = scmp.ne.s32.totalorder %s157, %s159
      %p163 = scmp.eq.s32.totalorder %s18, 0
      %p164 = por %p162, %p163
      %p165 = scmp.ne.s32.totalorder %s157, %s159
      %p166 = scmp.eq.s32.totalorder %s23, 1
      %p167 = por %p165, %p166
      %p168 = scmp.ne.s32.totalorder %s159, %s160
      %p169 = scmp.eq.s32.totalorder %s23, 0
      %p170 = por %p168, %p169
      %p171 = scmp.ne.s32.totalorder %s159, %s160
      %p172 = scmp.eq.s32.totalorder %s24, 1
      %p173 = por %p171, %p172
      %p175 = scmp.ne.s32.totalorder %s160, %s174
      %p176 = scmp.eq.s32.totalorder %s24, 0
      %p177 = por %p175, %p176
      %s179 = sadd.s32 %s178, 1
      %p182 = scmp.eq.s32.totalorder %s18, 1
      %p183 = scmp.ne.s32.totalorder %s178, %s180
      %p184 = scmp.eq.s32.totalorder %s18, 0
      %p185 = por %p183, %p184
      %p186 = scmp.ne.s32.totalorder %s178, %s180
      %p187 = scmp.eq.s32.totalorder %s23, 1
      %p188 = por %p186, %p187
      %p189 = scmp.ne.s32.totalorder %s180, %s181
      %p190 = scmp.eq.s32.totalorder %s23, 0
      %p191 = por %p189, %p190
      %p192 = scmp.ne.s32.totalorder %s180, %s181
      %p193 = scmp.eq.s32.totalorder %s24, 1
      %p194 = por %p192, %p193
      %p196 = scmp.ne.s32.totalorder %s181, %s195
      %p197 = scmp.eq.s32.totalorder %s24, 0
      %p198 = por %p196, %p197
      %s200 = sadd.s32 %s199, 1
      %p203 = scmp.eq.s32.totalorder %s18, 1
      %p204 = scmp.ne.s32.totalorder %s199, %s201
      %p205 = scmp.eq.s32.totalorder %s18, 0
      %p206 = por %p204, %p205
      %p207 = scmp.ne.s32.totalorder %s199, %s201
      %p208 = scmp.eq.s32.totalorder %s23, 1
      %p209 = por %p207, %p208
      %p210 = scmp.ne.s32.totalorder %s201, %s202
      %p211 = scmp.eq.s32.totalorder %s23, 0
      %p212 = por %p210, %p211
      %p213 = scmp.ne.s32.totalorder %s201, %s202
      %p214 = scmp.eq.s32.totalorder %s24, 1
      %p215 = por %p213, %p214
      %p217 = scmp.ne.s32.totalorder %s202, %s216
      %p218 = scmp.eq.s32.totalorder %s24, 0
      %p219 = por %p217, %p218
      %s220 = ssub.s32 %s18, %s25
      %p221 = scmp.eq.s32.totalorder %s220, 0
      %s223 = sadd.s32 %s222, 1
      %s224 = scalar_select %p221, %s222, %s223
      %p227 = pneg %p221
      %p228 = scmp.eq.s32.totalorder %s18, 1
      %p229 = por %p227, %p228
      %p230 = scmp.ne.s32.totalorder %s222, %s225
      %p231 = scmp.eq.s32.totalorder %s18, 0
      %p232 = por %p230, %p231
      %p233 = scmp.ne.s32.totalorder %s222, %s225
      %p234 = scmp.eq.s32.totalorder %s23, 1
      %p235 = por %p233, %p234
      %p236 = scmp.ne.s32.totalorder %s225, %s226
      %p237 = scmp.eq.s32.totalorder %s23, 0
      %p238 = por %p236, %p237
      %p239 = scmp.ne.s32.totalorder %s225, %s226
      %p240 = scmp.eq.s32.totalorder %s24, 1
      %p241 = por %p239, %p240
      %p243 = scmp.ne.s32.totalorder %s226, %s242
      %p244 = scmp.eq.s32.totalorder %s24, 0
      %p245 = por %p243, %p244
      %p246 = scmp.le.s32.totalorder 1, %s18
      %p247 = scmp.lt.s32.totalorder %s18, 3
      %p248 = pnand %p246, %p247
      %p249 = pneg %p248
      // Predicated region
      $region9: #{tpu_custom_call.1} parent=5 // pred_check
        _
      $region10: #{tpu_custom_call.1} parent=5 // pred_check_branch
        %251 = sbr.rel (%p248) target = $region12
      $region11: #{tpu_custom_call.1} parent=5 // pred_region
        %s252 = ssub.s32 %s18, 1
        // Predicated region
        $region13: #{tpu_custom_call.1} parent=11 // pred_check
          %p253 = pneg %p65
        $region14: #{tpu_custom_call.1} parent=11 // pred_check_branch
          %255 = sbr.rel (%p253) target = $region16
        $region15: #{tpu_custom_call.1} parent=11 // pred_region
          _
        $region16: #{tpu_custom_call.1} parent=11 // pred_fallthru
          _
        // Predicated region
        $region17: #{tpu_custom_call.1} parent=11 // pred_check
          %p256 = pneg %p86
        $region18: #{tpu_custom_call.1} parent=11 // pred_check_branch
          %258 = sbr.rel (%p256) target = $region20
        $region19: #{tpu_custom_call.1} parent=11 // pred_region
          _
        $region20: #{tpu_custom_call.1} parent=11 // pred_fallthru
          _
        // Predicated region
        $region21: #{tpu_custom_call.1} parent=11 // pred_check
          %p259 = pneg %p107
        $region22: #{tpu_custom_call.1} parent=11 // pred_check_branch
          %261 = sbr.rel (%p259) target = $region24
        $region23: #{tpu_custom_call.1} parent=11 // pred_region
          _
        $region24: #{tpu_custom_call.1} parent=11 // pred_fallthru
          _
        // Predicated region
        $region25: #{tpu_custom_call.1} parent=11 // pred_check
          %p262 = pneg %p128
        $region26: #{tpu_custom_call.1} parent=11 // pred_check_branch
          %264 = sbr.rel (%p262) target = $region28
        $region27: #{tpu_custom_call.1} parent=11 // pred_region
          _
        $region28: #{tpu_custom_call.1} parent=11 // pred_fallthru
          _
        // Predicated region
        $region29: #{tpu_custom_call.1} parent=11 // pred_check
          %p265 = pneg %p149
        $region30: #{tpu_custom_call.1} parent=11 // pred_check_branch
          %267 = sbr.rel (%p265) target = $region32
        $region31: #{tpu_custom_call.1} parent=11 // pred_region
          _
        $region32: #{tpu_custom_call.1} parent=11 // pred_fallthru
          _
        // Predicated region
        $region33: #{tpu_custom_call.1} parent=11 // pred_check
          %p268 = pneg %p170
        $region34: #{tpu_custom_call.1} parent=11 // pred_check_branch
          %270 = sbr.rel (%p268) target = $region36
        $region35: #{tpu_custom_call.1} parent=11 // pred_region
          _
        $region36: #{tpu_custom_call.1} parent=11 // pred_fallthru
          _
        // Predicated region
        $region37: #{tpu_custom_call.1} parent=11 // pred_check
          %p271 = pneg %p191
        $region38: #{tpu_custom_call.1} parent=11 // pred_check_branch
          %273 = sbr.rel (%p271) target = $region40
        $region39: #{tpu_custom_call.1} parent=11 // pred_region
          _
        $region40: #{tpu_custom_call.1} parent=11 // pred_fallthru
          _
        // Predicated region
        $region41: #{tpu_custom_call.1} parent=11 // pred_check
          %p274 = pneg %p212
        $region42: #{tpu_custom_call.1} parent=11 // pred_check_branch
          %276 = sbr.rel (%p274) target = $region44
        $region43: #{tpu_custom_call.1} parent=11 // pred_region
          _
        $region44: #{tpu_custom_call.1} parent=11 // pred_fallthru
          _
      $region12: #{tpu_custom_call.1} parent=5 // pred_fallthru
        _
      %p277 = scmp.lt.s32.totalorder %s18, 2
      // Predicated region
      $region45: #{tpu_custom_call.1} parent=5 // pred_check
        %p278 = pneg %p277
      $region46: #{tpu_custom_call.1} parent=5 // pred_check_branch
        %280 = sbr.rel (%p278) target = $region48
      $region47: #{tpu_custom_call.1} parent=5 // pred_region
        // Predicated region
        $region49: #{tpu_custom_call.1} parent=47 // pred_check
          %p281 = pneg %p38
        $region50: #{tpu_custom_call.1} parent=47 // pred_check_branch
          %283 = sbr.rel (%p281) target = $region52
        $region51: #{tpu_custom_call.1} parent=47 // pred_region
          %s284 = smul.u32 20, %s18
          %p285 = scmp.lt.s32.totalorder %s284, 39
          %s286 = scalar_select %p285, %s284, 39
          %s287 = smul.addr %s286, 8
          %s288 = scalar_lea.vmem %s0, %s287
          %s289 = smul.u32 20, %s18
        $region52: #{tpu_custom_call.1} parent=47 // pred_fallthru
          _
      $region48: #{tpu_custom_call.1} parent=5 // pred_fallthru
        _
      %p290 = scmp.le.s32.totalorder 1, %s18
      %p291 = scmp.lt.s32.totalorder %s18, 3
      %p292 = pnand %p290, %p291
      %p293 = pneg %p292
      // Predicated region
      $region53: #{tpu_custom_call.1} parent=5 // pred_check
        _
      $region54: #{tpu_custom_call.1} parent=5 // pred_check_branch
        %295 = sbr.rel (%p292) target = $region56
      $region55: #{tpu_custom_call.1} parent=5 // pred_region
        %s296 = ssub.s32 %s18, 1
        %s297 = smul.u32 20, %s23
        %p298 = scmp.lt.s32.totalorder %s297, 39
        %s299 = scalar_select %p298, %s297, 39
        %s300 = smul.addr %s299, 8
        %s301 = scalar_lea.vmem %s0, %s300
        %p302 = pneg %p44
        %p303 = pneg %p41
        %p304 = pneg %p65
        %p305 = pneg %p62
        %p306 = pneg %p86
        %p307 = pneg %p83
        %p308 = pneg %p107
        %p309 = pneg %p104
        %p310 = pneg %p128
        %p311 = pneg %p125
        %p312 = pneg %p149
        %p313 = pneg %p146
        %p314 = pneg %p170
        %p315 = pneg %p167
        %p316 = pneg %p191
        %p317 = pneg %p188
        %p318 = pneg %p212
        %p319 = pneg %p209
        %p320 = pneg %p238
        %p321 = pneg %p235
        %s322 = sand.u32 %s225, 1
        %s323 = scalar_lea.sflag [#allocation3], %s322
        %s324 = sand.u32 %s225, 1
        %s325 = smul.addr %s324, 80
        %s326 = scalar_lea.vmem [#allocation2], %s325
        %s327 = smul.u32 20, %s23
        %p328 = scmp.lt.s32.totalorder %s327, 39
        %s329 = scalar_select %p328, %s327, 39
        %s330 = smul.addr %s329, 8
        %s331 = scalar_lea.vmem %s0, %s330
        %s332 = smul.u32 20, %s23
        %s333 = smul.u32 20, %s23
        %v335 = vld [vmem:[%s331] sm:$0xff]
        %v336 = vld [vmem:[%s331 + $0x8] sm:$0xff]
        %v337 = vld [vmem:[%s331 + $0x10] sm:$0xff]
        %v338 = vld [vmem:[%s331 + $0x18] sm:$0xff]
        %v339 = vld [vmem:[%s331 + $0x20] sm:$0xff]
        %v340 = vld [vmem:[%s331 + $0x28] sm:$0xff]
        %v341 = vld [vmem:[%s331 + $0x30] sm:$0xff]
        %v342 = vld [vmem:[%s331 + $0x38] sm:$0xff]
        %v343 = vld [vmem:[%s331 + $0x40] sm:$0xff]
        %v344 = vld [vmem:[%s331 + $0x48] sm:$0xff]
        %v345 = vld [vmem:[%s331 + $0x50] sm:$0xff]
        %v346 = vld [vmem:[%s331 + $0x58] sm:$0xff]
        %v347 = vld [vmem:[%s331 + $0x60] sm:$0xff]
        %v348 = vld [vmem:[%s331 + $0x68] sm:$0xff]
        %v349 = vld [vmem:[%s331 + $0x70] sm:$0xff]
        %v350 = vld [vmem:[%s331 + $0x78] sm:$0xff]
        %v351 = vld [vmem:[%s331 + $0x80] sm:$0xff]
        %v352 = vld [vmem:[%s331 + $0x88] sm:$0xff]
        %v353 = vld [vmem:[%s331 + $0x90] sm:$0xff]
        %v354 = vld [vmem:[%s331 + $0x98] sm:$0xff]
        %v355 = vld [vmem:[%s1] sm:$0xff]
        %v356 = vld [vmem:[%s1 + $0x8] sm:$0xff]
        %v357 = vld [vmem:[%s1 + $0x10] sm:$0xff]
        %v358 = vld [vmem:[%s1 + $0x18] sm:$0xff]
        %vm359 = vcmask 261120
        %v361 = vsel %vm359, %v335, 0
        %v364 = vsel %vm359, %v336, 0
        %v367 = vsel %vm359, %v337, 0
        %v370 = vsel %vm359, %v338, 0
        %v373 = vsel %vm359, %v339, 0
        %v376 = vsel %vm359, %v340, 0
        %v379 = vsel %vm359, %v341, 0
        %v382 = vsel %vm359, %v342, 0
        %v385 = vsel %vm359, %v343, 0
        %v388 = vsel %vm359, %v344, 0
        %v391 = vsel %vm359, %v345, 0
        %v394 = vsel %vm359, %v346, 0
        %v397 = vsel %vm359, %v347, 0
        %v400 = vsel %vm359, %v348, 0
        %v403 = vsel %vm359, %v349, 0
        %v406 = vsel %vm359, %v350, 0
        %v409 = vsel %vm359, %v351, 0
        %v412 = vsel %vm359, %v352, 0
        %v415 = vsel %vm359, %v353, 0
        %v418 = vsel %vm359, %v354, 0
        %420 = vmatprep.subr.mxu0 0.0
        %421 = vmatpush1.msra.mxu0 %v355
        %422 = vmatprep.subr.mxu0 0.0
        %423 = vmatpush1.msra.mxu0 %v356
        %424 = vmatprep.subr.mxu0 0.0
        %425 = vmatpush1.msra.mxu0 %v357
        %426 = vmatprep.subr.mxu0 0.0
        %427 = vmatpush1.msra.mxu0 %v358
        %428 = vmatprep.subr.mxu0 0.0
        %429 = vmatpush1.msra.mxu0 0.0
        %430 = vmatprep.subr.mxu0 0.0
        %431 = vmatpush1.msra.mxu0 0.0
        %432 = vmatprep.subr.mxu0 0.0
        %433 = vmatpush1.msra.mxu0 0.0
        %434 = vmatprep.subr.mxu0 0.0
        %435 = vmatpush1.msra.mxu0 0.0
        %436 = vmatprep.subr.mxu0 0.0
        %437 = vmatpush1.msra.mxu0 0.0
        %438 = vmatprep.subr.mxu0 0.0
        %439 = vmatpush1.msra.mxu0 0.0
        %440 = vmatprep.subr.mxu0 0.0
        %441 = vmatpush1.msra.mxu0 0.0
        %442 = vmatprep.subr.mxu0 0.0
        %443 = vmatpush1.msra.mxu0 0.0
        %444 = vmatprep.subr.mxu0 0.0
        %445 = vmatpush1.msra.mxu0 0.0
        %446 = vmatprep.subr.mxu0 0.0
        %447 = vmatpush1.msra.mxu0 0.0
        %448 = vmatprep.subr.mxu0 0.0
        %449 = vmatpush1.msra.mxu0 0.0
        %450 = vmatprep.subr.mxu0 0.0
        %451 = vmatpush1.msra.mxu0 0.0
        %452 = vmatprep.subr.mxu0 0.0
        %453 = vmatpush1.msra.mxu0 0.0
        %454 = vmatprep.subr.mxu0 0.0
        %455 = vmatpush1.msra.mxu0 0.0
        %456 = vmatprep.subr.mxu0 0.0
        %457 = vmatpush1.msra.mxu0 0.0
        %458 = vmatprep.subr.mxu0 0.0
        %459 = vmatpush1.msra.mxu0 0.0
        %460 = vmatprep.subr.mxu0 0.0
        %461 = vmatpush1.msra.mxu0 0.0
        %462 = vmatprep.subr.mxu0 0.0
        %463 = vmatpush1.msra.mxu0 0.0
        %464 = vmatprep.subr.mxu0 0.0
        %465 = vmatpush1.msra.mxu0 0.0
        %466 = vmatprep.subr.mxu0 0.0
        %467 = vmatpush1.msra.mxu0 0.0
        %468 = vmatprep.subr.mxu0 0.0
        %469 = vmatpush1.msra.mxu0 0.0
        %470 = vmatprep.subr.mxu0 0.0
        %471 = vmatpush1.msra.mxu0 0.0
        %472 = vmatprep.subr.mxu0 0.0
        %473 = vmatpush1.msra.mxu0 0.0
        %474 = vmatprep.subr.mxu0 0.0
        %475 = vmatpush1.msra.mxu0 0.0
        %476 = vmatprep.subr.mxu0 0.0
        %477 = vmatpush1.msra.mxu0 0.0
        %478 = vmatprep.subr.mxu0 0.0
        %479 = vmatpush1.msra.mxu0 0.0
        %480 = vmatprep.subr.mxu0 0.0
        %481 = vmatpush1.msra.mxu0 0.0
        %482 = vmatprep.subr.mxu0 0.0
        %483 = vmatpush1.msra.mxu0 0.0
        %484 = vmatprep.mubr.f32.mxu0 0.0
        %485 = vmatmul.mubr.f32.gmra.mrb[0].mxu0 %v361
        %v486 = vpop.f32.mrb[0].mxu0
        %v487 = vadd.f32 0.0, %v486
        %v488 = vpop.f32.mrb[0].mxu0
        %489 = vmatprep.mubr.f32.mxu0 0.0
        %490 = vmatmul.mubr.f32.gmra.mrb[0].mxu0 %v364
        %v491 = vpop.f32.mrb[0].mxu0
        %v492 = vadd.f32 0.0, %v491
        %v493 = vpop.f32.mrb[0].mxu0
        %494 = vmatprep.mubr.f32.mxu0 0.0
        %495 = vmatmul.mubr.f32.gmra.mrb[0].mxu0 %v367
        %v496 = vpop.f32.mrb[0].mxu0
        %v497 = vadd.f32 0.0, %v496
        %v498 = vpop.f32.mrb[0].mxu0
        %499 = vmatprep.mubr.f32.mxu0 0.0
        %500 = vmatmul.mubr.f32.gmra.mrb[0].mxu0 %v370
        %v501 = vpop.f32.mrb[0].mxu0
        %v502 = vadd.f32 0.0, %v501
        %v503 = vpop.f32.mrb[0].mxu0
        %504 = vmatprep.mubr.f32.mxu0 0.0
        %505 = vmatmul.mubr.f32.gmra.mrb[0].mxu0 %v373
        %v506 = vpop.f32.mrb[0].mxu0
        %v507 = vadd.f32 0.0, %v506
        %v508 = vpop.f32.mrb[0].mxu0
        %509 = vmatprep.mubr.f32.mxu0 0.0
        %510 = vmatmul.mubr.f32.gmra.mrb[0].mxu0 %v376
        %v511 = vpop.f32.mrb[0].mxu0
        %v512 = vadd.f32 0.0, %v511
        %v513 = vpop.f32.mrb[0].mxu0
        %514 = vmatprep.mubr.f32.mxu0 0.0
        %515 = vmatmul.mubr.f32.gmra.mrb[0].mxu0 %v379
        %v516 = vpop.f32.mrb[0].mxu0
        %v517 = vadd.f32 0.0, %v516
        %v518 = vpop.f32.mrb[0].mxu0
        %519 = vmatprep.mubr.f32.mxu0 0.0
        %520 = vmatmul.mubr.f32.gmra.mrb[0].mxu0 %v382
        %v521 = vpop.f32.mrb[0].mxu0
        %v522 = vadd.f32 0.0, %v521
        %v523 = vpop.f32.mrb[0].mxu0
        %524 = vmatprep.mubr.f32.mxu0 0.0
        %525 = vmatmul.mubr.f32.gmra.mrb[0].mxu0 %v385
        %v526 = vpop.f32.mrb[0].mxu0
        %v527 = vadd.f32 0.0, %v526
        %v528 = vpop.f32.mrb[0].mxu0
        %529 = vmatprep.mubr.f32.mxu0 0.0
        %530 = vmatmul.mubr.f32.gmra.mrb[0].mxu0 %v388
        %v531 = vpop.f32.mrb[0].mxu0
        %v532 = vadd.f32 0.0, %v531
        %v533 = vpop.f32.mrb[0].mxu0
        %534 = vmatprep.mubr.f32.mxu0 0.0
        %535 = vmatmul.mubr.f32.gmra.mrb[0].mxu0 %v391
        %v536 = vpop.f32.mrb[0].mxu0
        %v537 = vadd.f32 0.0, %v536
        %v538 = vpop.f32.mrb[0].mxu0
        %539 = vmatprep.mubr.f32.mxu0 0.0
        %540 = vmatmul.mubr.f32.gmra.mrb[0].mxu0 %v394
        %v541 = vpop.f32.mrb[0].mxu0
        %v542 = vadd.f32 0.0, %v541
        %v543 = vpop.f32.mrb[0].mxu0
        %544 = vmatprep.mubr.f32.mxu0 0.0
        %545 = vmatmul.mubr.f32.gmra.mrb[0].mxu0 %v397
        %v546 = vpop.f32.mrb[0].mxu0
        %v547 = vadd.f32 0.0, %v546
        %v548 = vpop.f32.mrb[0].mxu0
        %549 = vmatprep.mubr.f32.mxu0 0.0
        %550 = vmatmul.mubr.f32.gmra.mrb[0].mxu0 %v400
        %v551 = vpop.f32.mrb[0].mxu0
        %v552 = vadd.f32 0.0, %v551
        %v553 = vpop.f32.mrb[0].mxu0
        %554 = vmatprep.mubr.f32.mxu0 0.0
        %555 = vmatmul.mubr.f32.gmra.mrb[0].mxu0 %v403
        %v556 = vpop.f32.mrb[0].mxu0
        %v557 = vadd.f32 0.0, %v556
        %v558 = vpop.f32.mrb[0].mxu0
        %559 = vmatprep.mubr.f32.mxu0 0.0
        %560 = vmatmul.mubr.f32.gmra.mrb[0].mxu0 %v406
        %v561 = vpop.f32.mrb[0].mxu0
        %v562 = vadd.f32 0.0, %v561
        %v563 = vpop.f32.mrb[0].mxu0
        %564 = vmatprep.mubr.f32.mxu0 0.0
        %565 = vmatmul.mubr.f32.gmra.mrb[0].mxu0 %v409
        %v566 = vpop.f32.mrb[0].mxu0
        %v567 = vadd.f32 0.0, %v566
        %v568 = vpop.f32.mrb[0].mxu0
        %569 = vmatprep.mubr.f32.mxu0 0.0
        %570 = vmatmul.mubr.f32.gmra.mrb[0].mxu0 %v412
        %v571 = vpop.f32.mrb[0].mxu0
        %v572 = vadd.f32 0.0, %v571
        %v573 = vpop.f32.mrb[0].mxu0
        %574 = vmatprep.mubr.f32.mxu0 0.0
        %575 = vmatmul.mubr.f32.gmra.mrb[0].mxu0 %v415
        %v576 = vpop.f32.mrb[0].mxu0
        %v577 = vadd.f32 0.0, %v576
        %v578 = vpop.f32.mrb[0].mxu0
        %579 = vmatprep.mubr.f32.mxu0 0.0
        %580 = vmatmul.mubr.f32.gmra.mrb[0].mxu0 %v418
        %v581 = vpop.f32.mrb[0].mxu0
        %v582 = vadd.f32 0.0, %v581
        %v583 = vpop.f32.mrb[0].mxu0
        %584 = vdwg.mxu0
        %v585 = vld [vmem:[%s2] sm:$0xff]
        %v586 = vld [vmem:[%s2 + $0x8] sm:$0xff]
        %v587 = vld [vmem:[%s2 + $0x10] sm:$0xff]
        %v588 = vld [vmem:[%s2 + $0x18] sm:$0xff]
        %589 = vmatprep.subr.mxu0 0.0
        %590 = vmatpush1.msra.mxu0 %v585
        %591 = vmatprep.subr.mxu0 0.0
        %592 = vmatpush1.msra.mxu0 %v586
        %593 = vmatprep.subr.mxu0 0.0
        %594 = vmatpush1.msra.mxu0 %v587
        %595 = vmatprep.subr.mxu0 0.0
        %596 = vmatpush1.msra.mxu0 %v588
        %597 = vmatprep.subr.mxu0 0.0
        %598 = vmatpush1.msra.mxu0 0.0
        %599 = vmatprep.subr.mxu0 0.0
        %600 = vmatpush1.msra.mxu0 0.0
        %601 = vmatprep.subr.mxu0 0.0
        %602 = vmatpush1.msra.mxu0 0.0
        %603 = vmatprep.subr.mxu0 0.0
        %604 = vmatpush1.msra.mxu0 0.0
        %605 = vmatprep.subr.mxu0 0.0
        %606 = vmatpush1.msra.mxu0 0.0
        %607 = vmatprep.subr.mxu0 0.0
        %608 = vmatpush1.msra.mxu0 0.0
        %609 = vmatprep.subr.mxu0 0.0
        %610 = vmatpush1.msra.mxu0 0.0
        %611 = vmatprep.subr.mxu0 0.0
        %612 = vmatpush1.msra.mxu0 0.0
        %613 = vmatprep.subr.mxu0 0.0
        %614 = vmatpush1.msra.mxu0 0.0
        %615 = vmatprep.subr.mxu0 0.0
        %616 = vmatpush1.msra.mxu0 0.0
        %617 = vmatprep.subr.mxu0 0.0
        %618 = vmatpush1.msra.mxu0 0.0
        %619 = vmatprep.subr.mxu0 0.0
        %620 = vmatpush1.msra.mxu0 0.0
        %621 = vmatprep.subr.mxu0 0.0
        %622 = vmatpush1.msra.mxu0 0.0
        %623 = vmatprep.subr.mxu0 0.0
        %624 = vmatpush1.msra.mxu0 0.0
        %625 = vmatprep.subr.mxu0 0.0
        %626 = vmatpush1.msra.mxu0 0.0
        %627 = vmatprep.subr.mxu0 0.0
        %628 = vmatpush1.msra.mxu0 0.0
        %629 = vmatprep.subr.mxu0 0.0
        %630 = vmatpush1.msra.mxu0 0.0
        %631 = vmatprep.subr.mxu0 0.0
        %632 = vmatpush1.msra.mxu0 0.0
        %633 = vmatprep.subr.mxu0 0.0
        %634 = vmatpush1.msra.mxu0 0.0
        %635 = vmatprep.subr.mxu0 0.0
        %636 = vmatpush1.msra.mxu0 0.0
        %637 = vmatprep.subr.mxu0 0.0
        %638 = vmatpush1.msra.mxu0 0.0
        %639 = vmatprep.subr.mxu0 0.0
        %640 = vmatpush1.msra.mxu0 0.0
        %641 = vmatprep.subr.mxu0 0.0
        %642 = vmatpush1.msra.mxu0 0.0
        %643 = vmatprep.subr.mxu0 0.0
        %644 = vmatpush1.msra.mxu0 0.0
        %645 = vmatprep.subr.mxu0 0.0
        %646 = vmatpush1.msra.mxu0 0.0
        %647 = vmatprep.subr.mxu0 0.0
        %648 = vmatpush1.msra.mxu0 0.0
        %649 = vmatprep.subr.mxu0 0.0
        %650 = vmatpush1.msra.mxu0 0.0
        %651 = vmatprep.subr.mxu0 0.0
        %652 = vmatpush1.msra.mxu0 0.0
        %653 = vmatprep.mubr.f32.mxu0 0.0
        %654 = vmatmul.mubr.f32.gmra.mrb[0].mxu0 %v361
        %v655 = vpop.f32.mrb[0].mxu0
        %v656 = vadd.f32 0.0, %v655
        %v657 = vpop.f32.mrb[0].mxu0
        %658 = vmatprep.mubr.f32.mxu0 0.0
        %659 = vmatmul.mubr.f32.gmra.mrb[0].mxu0 %v364
        %v660 = vpop.f32.mrb[0].mxu0
        %v661 = vadd.f32 0.0, %v660
        %v662 = vpop.f32.mrb[0].mxu0
        %663 = vmatprep.mubr.f32.mxu0 0.0
        %664 = vmatmul.mubr.f32.gmra.mrb[0].mxu0 %v367
        %v665 = vpop.f32.mrb[0].mxu0
        %v666 = vadd.f32 0.0, %v665
        %v667 = vpop.f32.mrb[0].mxu0
        %668 = vmatprep.mubr.f32.mxu0 0.0
        %669 = vmatmul.mubr.f32.gmra.mrb[0].mxu0 %v370
        %v670 = vpop.f32.mrb[0].mxu0
        %v671 = vadd.f32 0.0, %v670
        %v672 = vpop.f32.mrb[0].mxu0
        %673 = vmatprep.mubr.f32.mxu0 0.0
        %674 = vmatmul.mubr.f32.gmra.mrb[0].mxu0 %v373
        %v675 = vpop.f32.mrb[0].mxu0
        %v676 = vadd.f32 0.0, %v675
        %v677 = vpop.f32.mrb[0].mxu0
        %678 = vmatprep.mubr.f32.mxu0 0.0
        %679 = vmatmul.mubr.f32.gmra.mrb[0].mxu0 %v376
        %v680 = vpop.f32.mrb[0].mxu0
        %v681 = vadd.f32 0.0, %v680
        %v682 = vpop.f32.mrb[0].mxu0
        %683 = vmatprep.mubr.f32.mxu0 0.0
        %684 = vmatmul.mubr.f32.gmra.mrb[0].mxu0 %v379
        %v685 = vpop.f32.mrb[0].mxu0
        %v686 = vadd.f32 0.0, %v685
        %v687 = vpop.f32.mrb[0].mxu0
        %688 = vmatprep.mubr.f32.mxu0 0.0
        %689 = vmatmul.mubr.f32.gmra.mrb[0].mxu0 %v382
        %v690 = vpop.f32.mrb[0].mxu0
        %v691 = vadd.f32 0.0, %v690
        %v692 = vpop.f32.mrb[0].mxu0
        %693 = vmatprep.mubr.f32.mxu0 0.0
        %694 = vmatmul.mubr.f32.gmra.mrb[0].mxu0 %v385
        %v695 = vpop.f32.mrb[0].mxu0
        %v696 = vadd.f32 0.0, %v695
        %v697 = vpop.f32.mrb[0].mxu0
        %698 = vmatprep.mubr.f32.mxu0 0.0
        %699 = vmatmul.mubr.f32.gmra.mrb[0].mxu0 %v388
        %v700 = vpop.f32.mrb[0].mxu0
        %v701 = vadd.f32 0.0, %v700
        %v702 = vpop.f32.mrb[0].mxu0
        %703 = vmatprep.mubr.f32.mxu0 0.0
        %704 = vmatmul.mubr.f32.gmra.mrb[0].mxu0 %v391
        %v705 = vpop.f32.mrb[0].mxu0
        %v706 = vadd.f32 0.0, %v705
        %v707 = vpop.f32.mrb[0].mxu0
        %708 = vmatprep.mubr.f32.mxu0 0.0
        %709 = vmatmul.mubr.f32.gmra.mrb[0].mxu0 %v394
        %v710 = vpop.f32.mrb[0].mxu0
        %v711 = vadd.f32 0.0, %v710
        %v712 = vpop.f32.mrb[0].mxu0
        %713 = vmatprep.mubr.f32.mxu0 0.0
        %714 = vmatmul.mubr.f32.gmra.mrb[0].mxu0 %v397
        %v715 = vpop.f32.mrb[0].mxu0
        %v716 = vadd.f32 0.0, %v715
        %v717 = vpop.f32.mrb[0].mxu0
        %718 = vmatprep.mubr.f32.mxu0 0.0
        %719 = vmatmul.mubr.f32.gmra.mrb[0].mxu0 %v400
        %v720 = vpop.f32.mrb[0].mxu0
        %v721 = vadd.f32 0.0, %v720
        %v722 = vpop.f32.mrb[0].mxu0
        %723 = vmatprep.mubr.f32.mxu0 0.0
        %724 = vmatmul.mubr.f32.gmra.mrb[0].mxu0 %v403
        %v725 = vpop.f32.mrb[0].mxu0
        %v726 = vadd.f32 0.0, %v725
        %v727 = vpop.f32.mrb[0].mxu0
        %728 = vmatprep.mubr.f32.mxu0 0.0
        %729 = vmatmul.mubr.f32.gmra.mrb[0].mxu0 %v406
        %v730 = vpop.f32.mrb[0].mxu0
        %v731 = vadd.f32 0.0, %v730
        %v732 = vpop.f32.mrb[0].mxu0
        %733 = vmatprep.mubr.f32.mxu0 0.0
        %734 = vmatmul.mubr.f32.gmra.mrb[0].mxu0 %v409
        %v735 = vpop.f32.mrb[0].mxu0
        %v736 = vadd.f32 0.0, %v735
        %v737 = vpop.f32.mrb[0].mxu0
        %738 = vmatprep.mubr.f32.mxu0 0.0
        %739 = vmatmul.mubr.f32.gmra.mrb[0].mxu0 %v412
        %v740 = vpop.f32.mrb[0].mxu0
        %v741 = vadd.f32 0.0, %v740
        %v742 = vpop.f32.mrb[0].mxu0
        %743 = vmatprep.mubr.f32.mxu0 0.0
        %744 = vmatmul.mubr.f32.gmra.mrb[0].mxu0 %v415
        %v745 = vpop.f32.mrb[0].mxu0
        %v746 = vadd.f32 0.0, %v745
        %v747 = vpop.f32.mrb[0].mxu0
        %748 = vmatprep.mubr.f32.mxu0 0.0
        %749 = vmatmul.mubr.f32.gmra.mrb[0].mxu0 %v418
        %v750 = vpop.f32.mrb[0].mxu0
        %v751 = vadd.f32 0.0, %v750
        %v752 = vpop.f32.mrb[0].mxu0
        %753 = vdwg.mxu0
        %v754 = vmul.f32 %v487, %v487
        %v755 = vmul.f32 %v492, %v492
        %v756 = vmul.f32 %v497, %v497
        %v757 = vmul.f32 %v502, %v502
        %v758 = vmul.f32 %v507, %v507
        %v759 = vmul.f32 %v512, %v512
        %v760 = vmul.f32 %v517, %v517
        %v761 = vmul.f32 %v522, %v522
        %v762 = vmul.f32 %v527, %v527
        %v763 = vmul.f32 %v532, %v532
        %v764 = vmul.f32 %v537, %v537
        %v765 = vmul.f32 %v542, %v542
        %v766 = vmul.f32 %v547, %v547
        %v767 = vmul.f32 %v552, %v552
        %v768 = vmul.f32 %v557, %v557
        %v769 = vmul.f32 %v562, %v562
        %v770 = vmul.f32 %v567, %v567
        %v771 = vmul.f32 %v572, %v572
        %v772 = vmul.f32 %v577, %v577
        %v773 = vmul.f32 %v582, %v582
        %v774 = vmul.f32 %v656, %v656
        %v775 = vmul.f32 %v661, %v661
        %v776 = vmul.f32 %v666, %v666
        %v777 = vmul.f32 %v671, %v671
        %v778 = vmul.f32 %v676, %v676
        %v779 = vmul.f32 %v681, %v681
        %v780 = vmul.f32 %v686, %v686
        %v781 = vmul.f32 %v691, %v691
        %v782 = vmul.f32 %v696, %v696
        %v783 = vmul.f32 %v701, %v701
        %v784 = vmul.f32 %v706, %v706
        %v785 = vmul.f32 %v711, %v711
        %v786 = vmul.f32 %v716, %v716
        %v787 = vmul.f32 %v721, %v721
        %v788 = vmul.f32 %v726, %v726
        %v789 = vmul.f32 %v731, %v731
        %v790 = vmul.f32 %v736, %v736
        %v791 = vmul.f32 %v741, %v741
        %v792 = vmul.f32 %v746, %v746
        %v793 = vmul.f32 %v751, %v751
        %v794 = vadd.f32 %v754, %v774
        %v795 = vadd.f32 %v755, %v775
        %v796 = vadd.f32 %v756, %v776
        %v797 = vadd.f32 %v757, %v777
        %v798 = vadd.f32 %v758, %v778
        %v799 = vadd.f32 %v759, %v779
        %v800 = vadd.f32 %v760, %v780
        %v801 = vadd.f32 %v761, %v781
        %v802 = vadd.f32 %v762, %v782
        %v803 = vadd.f32 %v763, %v783
        %v804 = vadd.f32 %v764, %v784
        %v805 = vadd.f32 %v765, %v785
        %v806 = vadd.f32 %v766, %v786
        %v807 = vadd.f32 %v767, %v787
        %v808 = vadd.f32 %v768, %v788
        %v809 = vadd.f32 %v769, %v789
        %v810 = vadd.f32 %v770, %v790
        %v811 = vadd.f32 %v771, %v791
        %v812 = vadd.f32 %v772, %v792
        %v813 = vadd.f32 %v773, %v793
        %v814 = vpack.c.bf16 %v795, %v794
        %v815 = vpack.c.bf16 %v797, %v796
        %v816 = vpack.c.bf16 %v799, %v798
        %v817 = vpack.c.bf16 %v801, %v800
        %v818 = vpack.c.bf16 %v803, %v802
        %v819 = vpack.c.bf16 %v805, %v804
        %v820 = vpack.c.bf16 %v807, %v806
        %v821 = vpack.c.bf16 %v809, %v808
        %v822 = vpack.c.bf16 %v811, %v810
        %v823 = vpack.c.bf16 %v813, %v812
        %v824 = vld [vmem:[%s3] sm:$0xf]
        %v825 = vld [vmem:[%s4] sm:$0x1]
        %v827 = vlaneseq
        %v828 = vshrl.u32 %v827, 7
        %v829 = vsub.s32 0, %v828
        %v830 = vrot.slane %v825, %v829
        %vm832 = vcmask 64512
        %v834 = vsel %vm832, %v814, 0
        %v837 = vsel %vm832, %v815, 0
        %v840 = vsel %vm832, %v816, 0
        %v843 = vsel %vm832, %v817, 0
        %v846 = vsel %vm832, %v818, 0
        %v849 = vsel %vm832, %v819, 0
        %v852 = vsel %vm832, %v820, 0
        %v855 = vsel %vm832, %v821, 0
        %v858 = vsel %vm832, %v822, 0
        %v861 = vsel %vm832, %v823, 0
        %vm863 = vcmask 1043456
        %v865 = vsel %vm863, %v824, 0
        %867 = vmatprep.subr.bf16.mxu0 0
        %868 = vmatpush1.bf16.msra.mxu0 %v865
        %869 = vmatprep.subr.bf16.mxu0 0
        %870 = vmatpush1.bf16.msra.mxu0 0
        %871 = vmatprep.subr.bf16.mxu0 0
        %872 = vmatpush1.bf16.msra.mxu0 0
        %873 = vmatprep.subr.bf16.mxu0 0
        %874 = vmatpush1.bf16.msra.mxu0 0
        %875 = vmatprep.subr.bf16.mxu0 0
        %876 = vmatpush1.bf16.msra.mxu0 0
        %877 = vmatprep.subr.bf16.mxu0 0
        %878 = vmatpush1.bf16.msra.mxu0 0
        %879 = vmatprep.subr.bf16.mxu0 0
        %880 = vmatpush1.bf16.msra.mxu0 0
        %881 = vmatprep.subr.bf16.mxu0 0
        %882 = vmatpush1.bf16.msra.mxu0 0
        %883 = vmatprep.subr.bf16.mxu0 0
        %884 = vmatpush1.bf16.msra.mxu0 0
        %885 = vmatprep.subr.bf16.mxu0 0
        %886 = vmatpush1.bf16.msra.mxu0 0
        %887 = vmatprep.subr.bf16.mxu0 0
        %888 = vmatpush1.bf16.msra.mxu0 0
        %889 = vmatprep.subr.bf16.mxu0 0
        %890 = vmatpush1.bf16.msra.mxu0 0
        %891 = vmatprep.subr.bf16.mxu0 0
        %892 = vmatpush1.bf16.msra.mxu0 0
        %893 = vmatprep.subr.bf16.mxu0 0
        %894 = vmatpush1.bf16.msra.mxu0 0
        %895 = vmatprep.subr.bf16.mxu0 0
        %896 = vmatpush1.bf16.msra.mxu0 0
        %897 = vmatprep.subr.bf16.mxu0 0
        %898 = vmatpush1.bf16.msra.mxu0 0
        %899 = vmatprep.mubr.bf16.mxu0 0
        %900 = vmatmul.mubr.bf16.gmra.mrb[0].mxu0 %v834
        %v901 = vpop.f32.mrb[0].mxu0
        %v902 = vadd.f32 %v830, %v901
        %v903 = vpop.f32.mrb[0].mxu0
        %v904 = vpop.f32.mrb[0].mxu0
        %v905 = vadd.f32 %v830, %v904
        %v906 = vpop.f32.mrb[0].mxu0
        %907 = vmatprep.mubr.bf16.mxu0 0
        %908 = vmatmul.mubr.bf16.gmra.mrb[0].mxu0 %v837
        %v909 = vpop.f32.mrb[0].mxu0
        %v910 = vadd.f32 %v830, %v909
        %v911 = vpop.f32.mrb[0].mxu0
        %v912 = vpop.f32.mrb[0].mxu0
        %v913 = vadd.f32 %v830, %v912
        %v914 = vpop.f32.mrb[0].mxu0
        %915 = vmatprep.mubr.bf16.mxu0 0
        %916 = vmatmul.mubr.bf16.gmra.mrb[0].mxu0 %v840
        %v917 = vpop.f32.mrb[0].mxu0
        %v918 = vadd.f32 %v830, %v917
        %v919 = vpop.f32.mrb[0].mxu0
        %v920 = vpop.f32.mrb[0].mxu0
        %v921 = vadd.f32 %v830, %v920
        %v922 = vpop.f32.mrb[0].mxu0
        %923 = vmatprep.mubr.bf16.mxu0 0
        %924 = vmatmul.mubr.bf16.gmra.mrb[0].mxu0 %v843
        %v925 = vpop.f32.mrb[0].mxu0
        %v926 = vadd.f32 %v830, %v925
        %v927 = vpop.f32.mrb[0].mxu0
        %v928 = vpop.f32.mrb[0].mxu0
        %v929 = vadd.f32 %v830, %v928
        %v930 = vpop.f32.mrb[0].mxu0
        %931 = vmatprep.mubr.bf16.mxu0 0
        %932 = vmatmul.mubr.bf16.gmra.mrb[0].mxu0 %v846
        %v933 = vpop.f32.mrb[0].mxu0
        %v934 = vadd.f32 %v830, %v933
        %v935 = vpop.f32.mrb[0].mxu0
        %v936 = vpop.f32.mrb[0].mxu0
        %v937 = vadd.f32 %v830, %v936
        %v938 = vpop.f32.mrb[0].mxu0
        %939 = vmatprep.mubr.bf16.mxu0 0
        %940 = vmatmul.mubr.bf16.gmra.mrb[0].mxu0 %v849
        %v941 = vpop.f32.mrb[0].mxu0
        %v942 = vadd.f32 %v830, %v941
        %v943 = vpop.f32.mrb[0].mxu0
        %v944 = vpop.f32.mrb[0].mxu0
        %v945 = vadd.f32 %v830, %v944
        %v946 = vpop.f32.mrb[0].mxu0
        %947 = vmatprep.mubr.bf16.mxu0 0
        %948 = vmatmul.mubr.bf16.gmra.mrb[0].mxu0 %v852
        %v949 = vpop.f32.mrb[0].mxu0
        %v950 = vadd.f32 %v830, %v949
        %v951 = vpop.f32.mrb[0].mxu0
        %v952 = vpop.f32.mrb[0].mxu0
        %v953 = vadd.f32 %v830, %v952
        %v954 = vpop.f32.mrb[0].mxu0
        %955 = vmatprep.mubr.bf16.mxu0 0
        %956 = vmatmul.mubr.bf16.gmra.mrb[0].mxu0 %v855
        %v957 = vpop.f32.mrb[0].mxu0
        %v958 = vadd.f32 %v830, %v957
        %v959 = vpop.f32.mrb[0].mxu0
        %v960 = vpop.f32.mrb[0].mxu0
        %v961 = vadd.f32 %v830, %v960
        %v962 = vpop.f32.mrb[0].mxu0
        %963 = vmatprep.mubr.bf16.mxu0 0
        %964 = vmatmul.mubr.bf16.gmra.mrb[0].mxu0 %v858
        %v965 = vpop.f32.mrb[0].mxu0
        %v966 = vadd.f32 %v830, %v965
        %v967 = vpop.f32.mrb[0].mxu0
        %v968 = vpop.f32.mrb[0].mxu0
        %v969 = vadd.f32 %v830, %v968
        %v970 = vpop.f32.mrb[0].mxu0
        %971 = vmatprep.mubr.bf16.mxu0 0
        %972 = vmatmul.mubr.bf16.gmra.mrb[0].mxu0 %v861
        %v973 = vpop.f32.mrb[0].mxu0
        %v974 = vadd.f32 %v830, %v973
        %v975 = vpop.f32.mrb[0].mxu0
        %v976 = vpop.f32.mrb[0].mxu0
        %v977 = vadd.f32 %v830, %v976
        %v978 = vpop.f32.mrb[0].mxu0
        %979 = vdwg.mxu0
        %v980 = vmax.f32 %v902, 0.0
        %v981 = vmax.f32 %v905, 0.0
        %v982 = vmax.f32 %v910, 0.0
        %v983 = vmax.f32 %v913, 0.0
        %v984 = vmax.f32 %v918, 0.0
        %v985 = vmax.f32 %v921, 0.0
        %v986 = vmax.f32 %v926, 0.0
        %v987 = vmax.f32 %v929, 0.0
        %v988 = vmax.f32 %v934, 0.0
        %v989 = vmax.f32 %v937, 0.0
        %v990 = vmax.f32 %v942, 0.0
        %v991 = vmax.f32 %v945, 0.0
        %v992 = vmax.f32 %v950, 0.0
        %v993 = vmax.f32 %v953, 0.0
        %v994 = vmax.f32 %v958, 0.0
        %v995 = vmax.f32 %v961, 0.0
        %v996 = vmax.f32 %v966, 0.0
        %v997 = vmax.f32 %v969, 0.0
        %v998 = vmax.f32 %v974, 0.0
        %v999 = vmax.f32 %v977, 0.0
        %v1000 = vpack.c.bf16 %v981, %v980
        %v1001 = vpack.c.bf16 %v983, %v982
        %v1002 = vpack.c.bf16 %v985, %v984
        %v1003 = vpack.c.bf16 %v987, %v986
        %v1004 = vpack.c.bf16 %v989, %v988
        %v1005 = vpack.c.bf16 %v991, %v990
        %v1006 = vpack.c.bf16 %v993, %v992
        %v1007 = vpack.c.bf16 %v995, %v994
        %v1008 = vpack.c.bf16 %v997, %v996
        %v1009 = vpack.c.bf16 %v999, %v998
        %v1010 = vld [vmem:[%s5] sm:$0xf]
        %v1011 = vld [vmem:[%s5 + $0x4] sm:$0xf]
        %v1012 = vld [vmem:[%s6] sm:$0x1]
        %v1014 = vlaneseq
        %v1015 = vshrl.u32 %v1014, 7
        %v1016 = vsub.s32 0, %v1015
        %v1017 = vrot.slane %v1012, %v1016
        %v1021 = vunpack.c.l.b16 %v1010
        %v1022 = vunpack.c.l.b16 %v1011
        %v1023 = vpack.c.b16 %v1022, %v1021
        %vm1025 = vcmask 130048
        %v1027 = vsel %vm1025, %v1000, 0
        %v1030 = vsel %vm1025, %v1001, 0
        %v1033 = vsel %vm1025, %v1002, 0
        %v1036 = vsel %vm1025, %v1003, 0
        %v1039 = vsel %vm1025, %v1004, 0
        %v1042 = vsel %vm1025, %v1005, 0
        %v1045 = vsel %vm1025, %v1006, 0
        %v1048 = vsel %vm1025, %v1007, 0
        %v1051 = vsel %vm1025, %v1008, 0
        %v1054 = vsel %vm1025, %v1009, 0
        %1056 = vmatprep.subr.bf16.mxu0 0
        %1057 = vmatpush1.bf16.msra.mxu0 %v1023
        %1058 = vmatprep.subr.bf16.mxu0 0
        %1059 = vmatpush1.bf16.msra.mxu0 0
        %1060 = vmatprep.subr.bf16.mxu0 0
        %1061 = vmatpush1.bf16.msra.mxu0 0
        %1062 = vmatprep.subr.bf16.mxu0 0
        %1063 = vmatpush1.bf16.msra.mxu0 0
        %1064 = vmatprep.subr.bf16.mxu0 0
        %1065 = vmatpush1.bf16.msra.mxu0 0
        %1066 = vmatprep.subr.bf16.mxu0 0
        %1067 = vmatpush1.bf16.msra.mxu0 0
        %1068 = vmatprep.subr.bf16.mxu0 0
        %1069 = vmatpush1.bf16.msra.mxu0 0
        %1070 = vmatprep.subr.bf16.mxu0 0
        %1071 = vmatpush1.bf16.msra.mxu0 0
        %1072 = vmatprep.subr.bf16.mxu0 0
        %1073 = vmatpush1.bf16.msra.mxu0 0
        %1074 = vmatprep.subr.bf16.mxu0 0
        %1075 = vmatpush1.bf16.msra.mxu0 0
        %1076 = vmatprep.subr.bf16.mxu0 0
        %1077 = vmatpush1.bf16.msra.mxu0 0
        %1078 = vmatprep.subr.bf16.mxu0 0
        %1079 = vmatpush1.bf16.msra.mxu0 0
        %1080 = vmatprep.subr.bf16.mxu0 0
        %1081 = vmatpush1.bf16.msra.mxu0 0
        %1082 = vmatprep.subr.bf16.mxu0 0
        %1083 = vmatpush1.bf16.msra.mxu0 0
        %1084 = vmatprep.subr.bf16.mxu0 0
        %1085 = vmatpush1.bf16.msra.mxu0 0
        %1086 = vmatprep.subr.bf16.mxu0 0
        %1087 = vmatpush1.bf16.msra.mxu0 0
        %1088 = vmatprep.mubr.bf16.mxu0 0
        %1089 = vmatmul.mubr.bf16.gmra.mrb[0].mxu0 %v1027
        %v1090 = vpop.f32.mrb[0].mxu0
        %v1091 = vadd.f32 %v1017, %v1090
        %v1092 = vpop.f32.mrb[0].mxu0
        %v1093 = vpop.f32.mrb[0].mxu0
        %v1094 = vadd.f32 %v1017, %v1093
        %v1095 = vpop.f32.mrb[0].mxu0
        %1096 = vmatprep.mubr.bf16.mxu0 0
        %1097 = vmatmul.mubr.bf16.gmra.mrb[0].mxu0 %v1030
        %v1098 = vpop.f32.mrb[0].mxu0
        %v1099 = vadd.f32 %v1017, %v1098
        %v1100 = vpop.f32.mrb[0].mxu0
        %v1101 = vpop.f32.mrb[0].mxu0
        %v1102 = vadd.f32 %v1017, %v1101
        %v1103 = vpop.f32.mrb[0].mxu0
        %1104 = vmatprep.mubr.bf16.mxu0 0
        %1105 = vmatmul.mubr.bf16.gmra.mrb[0].mxu0 %v1033
        %v1106 = vpop.f32.mrb[0].mxu0
        %v1107 = vadd.f32 %v1017, %v1106
        %v1108 = vpop.f32.mrb[0].mxu0
        %v1109 = vpop.f32.mrb[0].mxu0
        %v1110 = vadd.f32 %v1017, %v1109
        %v1111 = vpop.f32.mrb[0].mxu0
        %1112 = vmatprep.mubr.bf16.mxu0 0
        %1113 = vmatmul.mubr.bf16.gmra.mrb[0].mxu0 %v1036
        %v1114 = vpop.f32.mrb[0].mxu0
        %v1115 = vadd.f32 %v1017, %v1114
        %v1116 = vpop.f32.mrb[0].mxu0
        %v1117 = vpop.f32.mrb[0].mxu0
        %v1118 = vadd.f32 %v1017, %v1117
        %v1119 = vpop.f32.mrb[0].mxu0
        %1120 = vmatprep.mubr.bf16.mxu0 0
        %1121 = vmatmul.mubr.bf16.gmra.mrb[0].mxu0 %v1039
        %v1122 = vpop.f32.mrb[0].mxu0
        %v1123 = vadd.f32 %v1017, %v1122
        %v1124 = vpop.f32.mrb[0].mxu0
        %v1125 = vpop.f32.mrb[0].mxu0
        %v1126 = vadd.f32 %v1017, %v1125
        %v1127 = vpop.f32.mrb[0].mxu0
        %1128 = vmatprep.mubr.bf16.mxu0 0
        %1129 = vmatmul.mubr.bf16.gmra.mrb[0].mxu0 %v1042
        %v1130 = vpop.f32.mrb[0].mxu0
        %v1131 = vadd.f32 %v1017, %v1130
        %v1132 = vpop.f32.mrb[0].mxu0
        %v1133 = vpop.f32.mrb[0].mxu0
        %v1134 = vadd.f32 %v1017, %v1133
        %v1135 = vpop.f32.mrb[0].mxu0
        %1136 = vmatprep.mubr.bf16.mxu0 0
        %1137 = vmatmul.mubr.bf16.gmra.mrb[0].mxu0 %v1045
        %v1138 = vpop.f32.mrb[0].mxu0
        %v1139 = vadd.f32 %v1017, %v1138
        %v1140 = vpop.f32.mrb[0].mxu0
        %v1141 = vpop.f32.mrb[0].mxu0
        %v1142 = vadd.f32 %v1017, %v1141
        %v1143 = vpop.f32.mrb[0].mxu0
        %1144 = vmatprep.mubr.bf16.mxu0 0
        %1145 = vmatmul.mubr.bf16.gmra.mrb[0].mxu0 %v1048
        %v1146 = vpop.f32.mrb[0].mxu0
        %v1147 = vadd.f32 %v1017, %v1146
        %v1148 = vpop.f32.mrb[0].mxu0
        %v1149 = vpop.f32.mrb[0].mxu0
        %v1150 = vadd.f32 %v1017, %v1149
        %v1151 = vpop.f32.mrb[0].mxu0
        %1152 = vmatprep.mubr.bf16.mxu0 0
        %1153 = vmatmul.mubr.bf16.gmra.mrb[0].mxu0 %v1051
        %v1154 = vpop.f32.mrb[0].mxu0
        %v1155 = vadd.f32 %v1017, %v1154
        %v1156 = vpop.f32.mrb[0].mxu0
        %v1157 = vpop.f32.mrb[0].mxu0
        %v1158 = vadd.f32 %v1017, %v1157
        %v1159 = vpop.f32.mrb[0].mxu0
        %1160 = vmatprep.mubr.bf16.mxu0 0
        %1161 = vmatmul.mubr.bf16.gmra.mrb[0].mxu0 %v1054
        %v1162 = vpop.f32.mrb[0].mxu0
        %v1163 = vadd.f32 %v1017, %v1162
        %v1164 = vpop.f32.mrb[0].mxu0
        %v1165 = vpop.f32.mrb[0].mxu0
        %v1166 = vadd.f32 %v1017, %v1165
        %v1167 = vpop.f32.mrb[0].mxu0
        %1168 = vdwg.mxu0
        %v1169 = vmax.f32 %v1091, 0.0
        %v1170 = vmax.f32 %v1094, 0.0
        %v1171 = vmax.f32 %v1099, 0.0
        %v1172 = vmax.f32 %v1102, 0.0
        %v1173 = vmax.f32 %v1107, 0.0
        %v1174 = vmax.f32 %v1110, 0.0
        %v1175 = vmax.f32 %v1115, 0.0
        %v1176 = vmax.f32 %v1118, 0.0
        %v1177 = vmax.f32 %v1123, 0.0
        %v1178 = vmax.f32 %v1126, 0.0
        %v1179 = vmax.f32 %v1131, 0.0
        %v1180 = vmax.f32 %v1134, 0.0
        %v1181 = vmax.f32 %v1139, 0.0
        %v1182 = vmax.f32 %v1142, 0.0
        %v1183 = vmax.f32 %v1147, 0.0
        %v1184 = vmax.f32 %v1150, 0.0
        %v1185 = vmax.f32 %v1155, 0.0
        %v1186 = vmax.f32 %v1158, 0.0
        %v1187 = vmax.f32 %v1163, 0.0
        %v1188 = vmax.f32 %v1166, 0.0
        %v1189 = vpack.c.bf16 %v1170, %v1169
        %v1190 = vpack.c.bf16 %v1172, %v1171
        %v1191 = vpack.c.bf16 %v1174, %v1173
        %v1192 = vpack.c.bf16 %v1176, %v1175
        %v1193 = vpack.c.bf16 %v1178, %v1177
        %v1194 = vpack.c.bf16 %v1180, %v1179
        %v1195 = vpack.c.bf16 %v1182, %v1181
        %v1196 = vpack.c.bf16 %v1184, %v1183
        %v1197 = vpack.c.bf16 %v1186, %v1185
        %v1198 = vpack.c.bf16 %v1188, %v1187
        %v1199 = vld [vmem:[%s7] sm:$0xf]
        %v1200 = vld [vmem:[%s7 + $0x4] sm:$0xf]
        %v1201 = vld [vmem:[%s7 + $0x8] sm:$0xf]
        %v1202 = vld [vmem:[%s8] sm:$0x1]
        %v1204 = vlaneseq
        %v1205 = vshrl.u32 %v1204, 7
        %v1206 = vsub.s32 0, %v1205
        %v1207 = vrot.slane %v1202, %v1206
        %v1212 = vunpack.c.l.b16 %v1199
        %v1213 = vunpack.c.l.b16 %v1200
        %v1214 = vunpack.c.l.b16 %v1201
        %v1215 = vpack.c.b16 %v1213, %v1212
        %v1216 = vpack.c.b16 %v1214, %v1214
        %vm1218 = vcmask 195584
        %v1220 = vsel %vm1218, %v1189, 0
        %v1223 = vsel %vm1218, %v1190, 0
        %v1226 = vsel %vm1218, %v1191, 0
        %v1229 = vsel %vm1218, %v1192, 0
        %v1232 = vsel %vm1218, %v1193, 0
        %v1235 = vsel %vm1218, %v1194, 0
        %v1238 = vsel %vm1218, %v1195, 0
        %v1241 = vsel %vm1218, %v1196, 0
        %v1244 = vsel %vm1218, %v1197, 0
        %v1247 = vsel %vm1218, %v1198, 0
        %v1250 = vsel %vm863, %v1216, 0
        %1252 = vmatprep.subr.bf16.mxu0 0
        %1253 = vmatpush1.bf16.msra.mxu0 %v1215
        %1254 = vmatprep.subr.bf16.mxu0 0
        %1255 = vmatpush1.bf16.msra.mxu0 %v1250
        %1256 = vmatprep.subr.bf16.mxu0 0
        %1257 = vmatpush1.bf16.msra.mxu0 0
        %1258 = vmatprep.subr.bf16.mxu0 0
        %1259 = vmatpush1.bf16.msra.mxu0 0
        %1260 = vmatprep.subr.bf16.mxu0 0
        %1261 = vmatpush1.bf16.msra.mxu0 0
        %1262 = vmatprep.subr.bf16.mxu0 0
        %1263 = vmatpush1.bf16.msra.mxu0 0
        %1264 = vmatprep.subr.bf16.mxu0 0
        %1265 = vmatpush1.bf16.msra.mxu0 0
        %1266 = vmatprep.subr.bf16.mxu0 0
        %1267 = vmatpush1.bf16.msra.mxu0 0
        %1268 = vmatprep.subr.bf16.mxu0 0
        %1269 = vmatpush1.bf16.msra.mxu0 0
        %1270 = vmatprep.subr.bf16.mxu0 0
        %1271 = vmatpush1.bf16.msra.mxu0 0
        %1272 = vmatprep.subr.bf16.mxu0 0
        %1273 = vmatpush1.bf16.msra.mxu0 0
        %1274 = vmatprep.subr.bf16.mxu0 0
        %1275 = vmatpush1.bf16.msra.mxu0 0
        %1276 = vmatprep.subr.bf16.mxu0 0
        %1277 = vmatpush1.bf16.msra.mxu0 0
        %1278 = vmatprep.subr.bf16.mxu0 0
        %1279 = vmatpush1.bf16.msra.mxu0 0
        %1280 = vmatprep.subr.bf16.mxu0 0
        %1281 = vmatpush1.bf16.msra.mxu0 0
        %1282 = vmatprep.subr.bf16.mxu0 0
        %1283 = vmatpush1.bf16.msra.mxu0 0
        %1284 = vmatprep.mubr.bf16.mxu0 0
        %1285 = vmatmul.mubr.bf16.gmra.mrb[0].mxu0 %v1220
        %v1286 = vpop.f32.mrb[0].mxu0
        %v1287 = vadd.f32 %v1207, %v1286
        %v1288 = vpop.f32.mrb[0].mxu0
        %v1289 = vpop.f32.mrb[0].mxu0
        %v1290 = vadd.f32 %v1207, %v1289
        %v1291 = vpop.f32.mrb[0].mxu0
        %1292 = vmatprep.mubr.bf16.mxu0 0
        %1293 = vmatmul.mubr.bf16.gmra.mrb[0].mxu0 %v1223
        %v1294 = vpop.f32.mrb[0].mxu0
        %v1295 = vadd.f32 %v1207, %v1294
        %v1296 = vpop.f32.mrb[0].mxu0
        %v1297 = vpop.f32.mrb[0].mxu0
        %v1298 = vadd.f32 %v1207, %v1297
        %v1299 = vpop.f32.mrb[0].mxu0
        %1300 = vmatprep.mubr.bf16.mxu0 0
        %1301 = vmatmul.mubr.bf16.gmra.mrb[0].mxu0 %v1226
        %v1302 = vpop.f32.mrb[0].mxu0
        %v1303 = vadd.f32 %v1207, %v1302
        %v1304 = vpop.f32.mrb[0].mxu0
        %v1305 = vpop.f32.mrb[0].mxu0
        %v1306 = vadd.f32 %v1207, %v1305
        %v1307 = vpop.f32.mrb[0].mxu0
        %1308 = vmatprep.mubr.bf16.mxu0 0
        %1309 = vmatmul.mubr.bf16.gmra.mrb[0].mxu0 %v1229
        %v1310 = vpop.f32.mrb[0].mxu0
        %v1311 = vadd.f32 %v1207, %v1310
        %v1312 = vpop.f32.mrb[0].mxu0
        %v1313 = vpop.f32.mrb[0].mxu0
        %v1314 = vadd.f32 %v1207, %v1313
        %v1315 = vpop.f32.mrb[0].mxu0
        %1316 = vmatprep.mubr.bf16.mxu0 0
        %1317 = vmatmul.mubr.bf16.gmra.mrb[0].mxu0 %v1232
        %v1318 = vpop.f32.mrb[0].mxu0
        %v1319 = vadd.f32 %v1207, %v1318
        %v1320 = vpop.f32.mrb[0].mxu0
        %v1321 = vpop.f32.mrb[0].mxu0
        %v1322 = vadd.f32 %v1207, %v1321
        %v1323 = vpop.f32.mrb[0].mxu0
        %1324 = vmatprep.mubr.bf16.mxu0 0
        %1325 = vmatmul.mubr.bf16.gmra.mrb[0].mxu0 %v1235
        %v1326 = vpop.f32.mrb[0].mxu0
        %v1327 = vadd.f32 %v1207, %v1326
        %v1328 = vpop.f32.mrb[0].mxu0
        %v1329 = vpop.f32.mrb[0].mxu0
        %v1330 = vadd.f32 %v1207, %v1329
        %v1331 = vpop.f32.mrb[0].mxu0
        %1332 = vmatprep.mubr.bf16.mxu0 0
        %1333 = vmatmul.mubr.bf16.gmra.mrb[0].mxu0 %v1238
        %v1334 = vpop.f32.mrb[0].mxu0
        %v1335 = vadd.f32 %v1207, %v1334
        %v1336 = vpop.f32.mrb[0].mxu0
        %v1337 = vpop.f32.mrb[0].mxu0
        %v1338 = vadd.f32 %v1207, %v1337
        %v1339 = vpop.f32.mrb[0].mxu0
        %1340 = vmatprep.mubr.bf16.mxu0 0
        %1341 = vmatmul.mubr.bf16.gmra.mrb[0].mxu0 %v1241
        %v1342 = vpop.f32.mrb[0].mxu0
        %v1343 = vadd.f32 %v1207, %v1342
        %v1344 = vpop.f32.mrb[0].mxu0
        %v1345 = vpop.f32.mrb[0].mxu0
        %v1346 = vadd.f32 %v1207, %v1345
        %v1347 = vpop.f32.mrb[0].mxu0
        %1348 = vmatprep.mubr.bf16.mxu0 0
        %1349 = vmatmul.mubr.bf16.gmra.mrb[0].mxu0 %v1244
        %v1350 = vpop.f32.mrb[0].mxu0
        %v1351 = vadd.f32 %v1207, %v1350
        %v1352 = vpop.f32.mrb[0].mxu0
        %v1353 = vpop.f32.mrb[0].mxu0
        %v1354 = vadd.f32 %v1207, %v1353
        %v1355 = vpop.f32.mrb[0].mxu0
        %1356 = vmatprep.mubr.bf16.mxu0 0
        %1357 = vmatmul.mubr.bf16.gmra.mrb[0].mxu0 %v1247
        %v1358 = vpop.f32.mrb[0].mxu0
        %v1359 = vadd.f32 %v1207, %v1358
        %v1360 = vpop.f32.mrb[0].mxu0
        %v1361 = vpop.f32.mrb[0].mxu0
        %v1362 = vadd.f32 %v1207, %v1361
        %v1363 = vpop.f32.mrb[0].mxu0
        %1364 = vdwg.mxu0
        %v1365 = vpack.c.bf16 %v1290, %v1287
        %v1366 = vpack.c.bf16 %v1298, %v1295
        %v1367 = vpack.c.bf16 %v1306, %v1303
        %v1368 = vpack.c.bf16 %v1314, %v1311
        %v1369 = vpack.c.bf16 %v1322, %v1319
        %v1370 = vpack.c.bf16 %v1330, %v1327
        %v1371 = vpack.c.bf16 %v1338, %v1335
        %v1372 = vpack.c.bf16 %v1346, %v1343
        %v1373 = vpack.c.bf16 %v1354, %v1351
        %v1374 = vpack.c.bf16 %v1362, %v1359
        %v1385 = vunpack.c.l.b16 %v1365
        %v1386 = vunpack.c.h.b16 %v1365
        %v1387 = vunpack.c.l.b16 %v1366
        %v1388 = vunpack.c.h.b16 %v1366
        %v1389 = vunpack.c.l.b16 %v1367
        %v1390 = vunpack.c.h.b16 %v1367
        %v1391 = vunpack.c.l.b16 %v1368
        %v1392 = vunpack.c.h.b16 %v1368
        %v1393 = vunpack.c.l.b16 %v1369
        %v1394 = vunpack.c.h.b16 %v1369
        %v1395 = vunpack.c.l.b16 %v1370
        %v1396 = vunpack.c.h.b16 %v1370
        %v1397 = vunpack.c.l.b16 %v1371
        %v1398 = vunpack.c.h.b16 %v1371
        %v1399 = vunpack.c.l.b16 %v1372
        %v1400 = vunpack.c.h.b16 %v1372
        %v1401 = vunpack.c.l.b16 %v1373
        %v1402 = vunpack.c.h.b16 %v1373
        %v1403 = vunpack.c.l.b16 %v1374
        %v1404 = vunpack.c.h.b16 %v1374
        %v1405 = vpack.c.b16 %v1385, %v1385
        %v1406 = vpack.c.b16 %v1386, %v1386
        %v1407 = vpack.c.b16 %v1387, %v1387
        %v1408 = vpack.c.b16 %v1388, %v1388
        %v1409 = vpack.c.b16 %v1389, %v1389
        %v1410 = vpack.c.b16 %v1390, %v1390
        %v1411 = vpack.c.b16 %v1391, %v1391
        %v1412 = vpack.c.b16 %v1392, %v1392
        %v1413 = vpack.c.b16 %v1393, %v1393
        %v1414 = vpack.c.b16 %v1394, %v1394
        %v1415 = vpack.c.b16 %v1395, %v1395
        %v1416 = vpack.c.b16 %v1396, %v1396
        %v1417 = vpack.c.b16 %v1397, %v1397
        %v1418 = vpack.c.b16 %v1398, %v1398
        %v1419 = vpack.c.b16 %v1399, %v1399
        %v1420 = vpack.c.b16 %v1400, %v1400
        %v1421 = vpack.c.b16 %v1401, %v1401
        %v1422 = vpack.c.b16 %v1402, %v1402
        %v1423 = vpack.c.b16 %v1403, %v1403
        %v1424 = vpack.c.b16 %v1404, %v1404
        %1445 = vst [vmem:[%s326] sm:$0xf] %v1405
        %1446 = vst [vmem:[%s326 + $0x4] sm:$0xf] %v1406
        %1447 = vst [vmem:[%s326 + $0x8] sm:$0xf] %v1407
        %1448 = vst [vmem:[%s326 + $0xc] sm:$0xf] %v1408
        %1449 = vst [vmem:[%s326 + $0x10] sm:$0xf] %v1409
        %1450 = vst [vmem:[%s326 + $0x14] sm:$0xf] %v1410
        %1451 = vst [vmem:[%s326 + $0x18] sm:$0xf] %v1411
        %1452 = vst [vmem:[%s326 + $0x1c] sm:$0xf] %v1412
        %1453 = vst [vmem:[%s326 + $0x20] sm:$0xf] %v1413
        %1454 = vst [vmem:[%s326 + $0x24] sm:$0xf] %v1414
        %1455 = vst [vmem:[%s326 + $0x28] sm:$0xf] %v1415
        %1456 = vst [vmem:[%s326 + $0x2c] sm:$0xf] %v1416
        %1457 = vst [vmem:[%s326 + $0x30] sm:$0xf] %v1417
        %1458 = vst [vmem:[%s326 + $0x34] sm:$0xf] %v1418
        %1459 = vst [vmem:[%s326 + $0x38] sm:$0xf] %v1419
        %1460 = vst [vmem:[%s326 + $0x3c] sm:$0xf] %v1420
        %1461 = vst [vmem:[%s326 + $0x40] sm:$0xf] %v1421
        %1462 = vst [vmem:[%s326 + $0x44] sm:$0xf] %v1422
        %1463 = vst [vmem:[%s326 + $0x48] sm:$0xf] %v1423
        %1464 = vst [vmem:[%s326 + $0x4c] sm:$0xf] %v1424
        %s1465 = sand.u32 %s225, 1
        %s1466 = scalar_lea.sflag [#allocation3], %s1465
        %s1467 = sand.u32 %s225, 1
        %s1468 = smul.addr %s1467, 80
        %s1469 = scalar_lea.vmem [#allocation2], %s1468
        // Predicated region
        $region57: #{tpu_custom_call.1} parent=55 // pred_check
          %p1470 = pneg %p235
        $region58: #{tpu_custom_call.1} parent=55 // pred_check_branch
          %1472 = sbr.rel (%p1470) target = $region60
        $region59: #{tpu_custom_call.1} parent=55 // pred_region
          %s1473 = smul.u32 20, %s23
          %s1475 = ssub.s32 1280, 1280
          %1476 = vsyncadd %s1466, %s1475
          %s1477 = smul.addr %s1473, 64
          %s1478 = scalar_lea.hbm %s9, %s1477
          %s1479 = sshll.u32 %s1469, 4
          %s1480 = int_to_ptr.vmem [resolvable:$true] %s1479
          %1485 = dma.vmem_to_hbm [thread:$0]  %s1480, 1280, %s1478, %s1466, 64, 64, 4
        $region60: #{tpu_custom_call.1} parent=55 // pred_fallthru
          _
      $region56: #{tpu_custom_call.1} parent=5 // pred_fallthru
        _
      %p1486 = scmp.le.s32.totalorder 2, %s18
      // Predicated region
      $region61: #{tpu_custom_call.1} parent=5 // pred_check
        %p1487 = pneg %p1486
      $region62: #{tpu_custom_call.1} parent=5 // pred_check_branch
        %1489 = sbr.rel (%p1487) target = $region64
      $region63: #{tpu_custom_call.1} parent=5 // pred_region
        %s1490 = ssub.s32 %s18, 2
        // Predicated region
        $region65: #{tpu_custom_call.1} parent=63 // pred_check
          %p1491 = pneg %p241
        $region66: #{tpu_custom_call.1} parent=63 // pred_check_branch
          %1493 = sbr.rel (%p1491) target = $region68
        $region67: #{tpu_custom_call.1} parent=63 // pred_region
          %s1494 = sand.u32 %s226, 1
          %s1495 = scalar_lea.sflag [#allocation3], %s1494
          %s1496 = sand.u32 %s226, 1
          %s1497 = smul.addr %s1496, 80
          %s1498 = scalar_lea.vmem [#allocation2], %s1497
          %1499 = dma.done %s1495, 1280
        $region68: #{tpu_custom_call.1} parent=63 // pred_fallthru
          _
      $region64: #{tpu_custom_call.1} parent=5 // pred_fallthru
        _
    $region6: #{tpu_custom_call.1} parent=1 // loop_footer
      %s22 = sadd.s32 1, %s18
    $region7: #{tpu_custom_call.1} parent=1 // loop_footer_branch
      %17 = sbr.rel target = $region3
    $region8: #{tpu_custom_call.1} parent=1 // loop_exit
      _
    %1500 = vsyncpa [#allocation3], 1
    %s1501 = scalar_lea.sflag [#allocation3], 1
    %1502 = vsyncpa %s1501, 1

</llo_original>
